<compile_context>
chip_gen: v7x
topology: tpu7x:2x2x1
jax: 0.10.0
libtpu: 0.0.40
codegen_flags: <defaults>
</compile_context>

<pallas_src>
import jax
import jax.numpy as jnp
from jax.experimental import pallas as pl
from jax.experimental.pallas import tpu as pltpu

BN_EPS = 1e-5
FC_OUT = 64    # fc_policy / fc1_value output width
SP = 128       # per-batch spatial lanes (H*W = 64 padded to a full lane group)


# ---------------------------------------------------------------------------
# Parameters (shapes from OutBlock.__init__), deterministic init
# ---------------------------------------------------------------------------
def init_params(key):
    ks = jax.random.split(key, 14)
    rn = lambda k, s, scale=0.05: scale * jax.random.normal(k, s, dtype=jnp.float32)
    return dict(
        wp=rn(ks[0], (2, 256, 1, 1)), bp=rn(ks[1], (2,)),        # policy conv 1x1
        gp=1.0 + rn(ks[2], (2,)), betap=rn(ks[3], (2,)),         # policy BN
        wv=rn(ks[4], (2, 256, 3, 3)), bv=rn(ks[5], (2,)),        # value conv 3x3 pad=1
        gv=1.0 + rn(ks[6], (2,)), betav=rn(ks[7], (2,)),         # value BN
        wfp=rn(ks[8], (64, 128)), bfp=rn(ks[9], (64,)),          # fc_policy
        w1=rn(ks[10], (64, 128)), b1=rn(ks[11], (64,)),          # fc1_value
        w2=rn(ks[12], (1, 64)), b2=rn(ks[13], (1,)),             # fc2_value
    )


# ---------------------------------------------------------------------------
# One-time parameter packing (hoisted out of the per-call path)
# ---------------------------------------------------------------------------
def pack_params(p):
    C = p["wv"].shape[1]
    HW = 64

    # Conv tap stack (72, C) bf16: rows 8t+{0,1} = 3x3 value-conv weights of tap t;
    # rows 8*4+{2,3} = 1x1 policy-conv weights (center tap only); other rows zero.
    wv_taps = jnp.transpose(p["wv"], (2, 3, 0, 1)).reshape(9, 2, C)     # [t, c, cin]
    blocks = jnp.zeros((9, 8, C), jnp.float32)
    blocks = blocks.at[:, 0:2, :].set(wv_taps)
    blocks = blocks.at[4, 2:4, :].set(p["wp"][:, :, 0, 0])
    wstack = blocks.reshape(72, C).astype(jnp.bfloat16)

    # Head weight (SP, 4*SP) f32.  Per batch row: R = bn_n (4,SP) @ ws; packed
    # head vector = sum_c R[c, c*SP:(c+1)*SP]; cols 0:64 = policy logits, cols
    # 64:128 = value fc1.  Rows s >= HW stay zero (spatial padding lanes).
    ws = jnp.zeros((SP, 4 * SP), jnp.float32)
    ws = ws.at[0:HW, 0 * SP + 64:0 * SP + 128].set(p["w1"][:, 0:HW].T)        # value ch0
    ws = ws.at[0:HW, 1 * SP + 64:1 * SP + 128].set(p["w1"][:, HW:2 * HW].T)   # value ch1
    ws = ws.at[0:HW, 2 * SP + 0:2 * SP + 64].set(p["wfp"][:, 0:HW].T)         # policy ch0
    ws = ws.at[0:HW, 3 * SP + 0:3 * SP + 64].set(p["wfp"][:, HW:2 * HW].T)    # policy ch1

    # Per-conv-channel scalars, rows = [value c0, value c1, policy c0, policy c1]:
    # col0 conv bias, col1 BN gamma, col2 BN beta.
    spc = jnp.stack([
        jnp.concatenate([p["bv"], p["bp"]]),
        jnp.concatenate([p["gv"], p["gp"]]),
        jnp.concatenate([p["betav"], p["betap"]]),
        jnp.zeros((4,), jnp.float32),
    ], axis=1)                                                          # (4, 4)

    # Head scalars: row0 fc_policy bias, row1 fc1 bias, row2 fc2 weight, row3[0] fc2 bias.
    sph = jnp.zeros((4, FC_OUT), jnp.float32)
    sph = sph.at[0].set(p["bfp"])
    sph = sph.at[1].set(p["b1"])
    sph = sph.at[2].set(p["w2"].reshape(-1))
    sph = sph.at[3, 0].set(p["b2"][0])

    return dict(wstack=wstack, ws=ws, spc=spc, sph=sph)


# ---------------------------------------------------------------------------
# Forward: one fused Pallas kernel; only layout glue stays in XLA
# ---------------------------------------------------------------------------
@jax.jit
def out_block_forward(x, packed):
    N, C, H, W = x.shape
    HW = H * W
    assert HW == 64 and (W & (W - 1)) == 0 and SP % W == 0
    NL = N * SP
    w_shift = W.bit_length() - 1

    def kernel(x_ref, wstk_ref, ws_ref, spc_ref, sph_ref, out_ref):
        # ---- conv stage: one MXU dot for all 9 taps x channels ---------------
        base = jnp.dot(wstk_ref[...], x_ref[...],
                       preferred_element_type=jnp.float32)              # (72, NL)

        lane = jax.lax.broadcasted_iota(jnp.int32, (1, NL), 1)
        j = jnp.bitwise_and(lane, SP - 1)        # spatial index within batch block
        hh = jnp.right_shift(j, w_shift)
        ww = jnp.bitwise_and(j, W - 1)
        valid = hh < H                           # lanes [HW, SP) are padding

        # Each tap = lane-roll of its 8-row block of `base` + boundary mask.
        acc = None
        for t in range(9):
            ky, kx = t // 3, t % 3
            dy, dx = ky - 1, kx - 1
            shift = dy * W + dx
            blk = base[8 * t:8 * t + 8, :]
            if shift != 0:
                blk = pltpu.roll(blk, (-shift) % NL, axis=1)   # out[L] = blk[L+shift]
            m = ((hh + dy >= 0) & (hh + dy < H) &
                 (ww + dx >= 0) & (ww + dx < W) & valid)
            contrib = jnp.where(m, blk, 0.0)
            acc = contrib if acc is None else acc + contrib
        acc = acc[0:4, :]                        # rows: [value c0, value c1, policy c0, policy c1]

        # ---- bias -> ReLU -> BatchNorm (training mode, batch stats, two-pass var)
        z = jnp.maximum(acc + spc_ref[:, 0:1], 0.0)
        z = jnp.where(valid, z, 0.0)
        inv_n = 1.0 / (N * HW)
        mu = jnp.sum(z, axis=1, keepdims=True) * inv_n
        d = jnp.where(valid, z - mu, 0.0)
        var = jnp.sum(d * d, axis=1, keepdims=True) * inv_n
        bn = d * jax.lax.rsqrt(var + BN_EPS) * spc_ref[:, 1:2] + spc_ref[:, 2:3]

        # ---- both FC heads as MXU dots (zero rows of ws kill padding lanes) --
        wsv = ws_ref[...]
        heads = []
        for n in range(N):
            r = jnp.dot(bn[:, n * SP:(n + 1) * SP], wsv,
                        preferred_element_type=jnp.float32)             # (4, 4*SP)
            heads.append(r[0:1, 0:SP] + r[1:2, SP:2 * SP]
                         + r[2:3, 2 * SP:3 * SP] + r[3:4, 3 * SP:4 * SP])
        hall = jnp.concatenate(heads, axis=0)                           # (N, 128)

        # policy head: softmax (exact reciprocal -> rows sum to 1)
        logits = hall[:, 0:FC_OUT] + sph_ref[0:1, :]
        e = jnp.exp(logits - jnp.max(logits, axis=-1, keepdims=True))
        policy = e / jnp.sum(e, axis=-1, keepdims=True)

        # value head: ReLU(fc1) -> fc2 -> tanh
        h1 = jnp.maximum(hall[:, FC_OUT:2 * FC_OUT] + sph_ref[1:2, :], 0.0)
        v = jnp.sum(h1 * sph_ref[2:3, :], axis=-1, keepdims=True) + sph_ref[3:4, 0:1]
        v = jnp.tanh(v)

        # single lane-dense (N, 128) store: policy in 0:64, value broadcast in 64:128
        out_ref[...] = jnp.concatenate(
            [policy, jnp.broadcast_to(v, (N, FC_OUT))], axis=-1)

    # ---- input glue: bf16 cast BEFORE transpose/pad; lane-dense (C, N*128) layout
    xb = x.astype(jnp.bfloat16)
    xt = jnp.transpose(xb, (1, 0, 2, 3)).reshape(C, N, HW)
    x_flat = jnp.pad(xt, ((0, 0), (0, 0), (0, SP - HW))).reshape(C, NL)

    vmem = lambda: pl.BlockSpec(memory_space=pltpu.MemorySpace.VMEM)
    out = pl.pallas_call(
        kernel,
        out_shape=jax.ShapeDtypeStruct((N, 2 * FC_OUT), jnp.float32),
        in_specs=[vmem()] * 5,
        out_specs=vmem(),
        compiler_params=pltpu.CompilerParams(vmem_limit_bytes=32 * 1024 * 1024),
    )(x_flat, packed["wstack"], packed["ws"], packed["spc"], packed["sph"])

    return out[:, :FC_OUT], out[:, FC_OUT]                              # (N, 64), (N,)


# ---------------------------------------------------------------------------
# Pure-JAX reference (mirrors the PyTorch forward), bf16-matched conv inputs
# ---------------------------------------------------------------------------
def reference_forward(x, params):
    N = x.shape[0]
    hp = jax.lax.Precision.HIGHEST
    bf = lambda a: a.astype(jnp.bfloat16).astype(jnp.float32)   # match kernel's bf16 MXU inputs

    def conv2d(xx, w, b, pad):
        y = jax.lax.conv_general_dilated(
            bf(xx), bf(w), (1, 1), [(pad, pad), (pad, pad)],
            dimension_numbers=("NCHW", "OIHW", "NCHW"), precision=hp)
        return y + b.reshape(1, -1, 1, 1)

    def bn(y, g, beta):
        mu = jnp.mean(y, axis=(0, 2, 3), keepdims=True)
        var = jnp.mean((y - mu) ** 2, axis=(0, 2, 3), keepdims=True)
        return (y - mu) * jax.lax.rsqrt(var + BN_EPS) * g.reshape(1, -1, 1, 1) + beta.reshape(1, -1, 1, 1)

    lin = lambda a, w, b: jnp.matmul(a, w.T, precision=hp) + b

    x = x.astype(jnp.float32)
    p = bn(jnp.maximum(conv2d(x, params["wp"], params["bp"], 0), 0.0), params["gp"], params["betap"])
    v = bn(jnp.maximum(conv2d(x, params["wv"], params["bv"], 1), 0.0), params["gv"], params["betav"])
    p = jax.nn.softmax(lin(p.reshape(N, -1), params["wfp"], params["bfp"]), axis=1)
    h = jnp.maximum(lin(v.reshape(N, -1), params["w1"], params["b1"]), 0.0)
    v = jnp.tanh(lin(h, params["w2"], params["b2"])).reshape(-1)
    return p, v


if __name__ == "__main__":
    key = jax.random.PRNGKey(0)
    kx, kp = jax.random.split(key)
    x = jax.random.normal(kx, (2, 256, 8, 8), dtype=jnp.float32)   # NCHW, as in PyTorch
    params = init_params(kp)
    packed = pack_params(params)      # one-time packing, outside the per-call path

    policy, value = out_block_forward(x, packed)
    jax.block_until_ready((policy, value))

    ref_p, ref_v = reference_forward(x, params)
    assert policy.shape == (2, 64) and value.shape == (2,)
    # tolerances absorb bf16 conv inputs + accumulation-order differences
    assert jnp.allclose(policy, ref_p, rtol=2e-2, atol=1e-4), float(jnp.max(jnp.abs(policy - ref_p)))
    assert jnp.allclose(value, ref_v, rtol=2e-2, atol=1e-3), float(jnp.max(jnp.abs(value - ref_v)))
    print("KERNEL_OK")
</pallas_src>

<mosaic_0001>
module attributes {stable_mosaic.version = 11 : i64} {
  func.func @kernel(%arg0: memref<256x256xbf16, #tpu.memory_space<vmem>>, %arg1: memref<72x256xbf16, #tpu.memory_space<vmem>>, %arg2: memref<128x512xf32, #tpu.memory_space<vmem>>, %arg3: memref<4x4xf32, #tpu.memory_space<vmem>>, %arg4: memref<4x64xf32, #tpu.memory_space<vmem>>, %arg5: memref<2x128xf32, #tpu.memory_space<vmem>>) attributes {dimension_semantics = [], scalar_prefetch = 0 : i64, scratch_operands = 0 : i64, tpu.core_type = #tpu.core_type<tc>} {
    %c0 = arith.constant 0 : index
    %c0_0 = arith.constant 0 : index
    %0 = vector.load %arg1[%c0, %c0_0] : memref<72x256xbf16, #tpu.memory_space<vmem>>, vector<72x256xbf16>
    %c0_1 = arith.constant 0 : index
    %c0_2 = arith.constant 0 : index
    %1 = vector.load %arg0[%c0_1, %c0_2] : memref<256x256xbf16, #tpu.memory_space<vmem>>, vector<256x256xbf16>
    %cst = arith.constant dense<0.000000e+00> : vector<72x256xf32>
    %2 = tpu.matmul %0, %1, %cst {dimension_numbers = #tpu.dot_dimension_numbers<[1], [0], [0], [1], [0, 0, 1, 1], [], []>} : vector<72x256xbf16>, vector<256x256xbf16>, vector<72x256xf32> -> vector<72x256xf32>
    %3 = tpu.iota {dimensions = array<i32: 1>} : vector<1x256xi32>
    %c127_i32 = arith.constant 127 : i32
    %4 = vector.broadcast %c127_i32 : i32 to vector<1x256xi32>
    %5 = arith.andi %3, %4 : vector<1x256xi32>
    %c3_i32 = arith.constant 3 : i32
    %6 = vector.broadcast %c3_i32 : i32 to vector<1x256xi32>
    %7 = arith.shrsi %5, %6 : vector<1x256xi32>
    %c7_i32 = arith.constant 7 : i32
    %8 = vector.broadcast %c7_i32 : i32 to vector<1x256xi32>
    %9 = arith.andi %5, %8 : vector<1x256xi32>
    %c8_i32 = arith.constant 8 : i32
    %10 = vector.broadcast %c8_i32 : i32 to vector<1x256xi32>
    %11 = arith.cmpi slt, %7, %10 : vector<1x256xi32>
    %12 = vector.extract_strided_slice %2 {offsets = [0, 0], sizes = [8, 256], strides = [1, 1]} : vector<72x256xf32> to vector<8x256xf32>
    %c9_i32 = arith.constant 9 : i32
    %13 = tpu.dynamic_rotate %12 by %c9_i32 dim 1 : vector<8x256xf32>, i32 -> vector<8x256xf32>
    %c-1_i32 = arith.constant -1 : i32
    %14 = vector.broadcast %c-1_i32 : i32 to vector<1x256xi32>
    %15 = arith.addi %7, %14 : vector<1x256xi32>
    %c0_i32 = arith.constant 0 : i32
    %16 = vector.broadcast %c0_i32 : i32 to vector<1x256xi32>
    %17 = arith.cmpi sge, %15, %16 : vector<1x256xi32>
    %c-1_i32_3 = arith.constant -1 : i32
    %18 = vector.broadcast %c-1_i32_3 : i32 to vector<1x256xi32>
    %19 = arith.addi %7, %18 : vector<1x256xi32>
    %c8_i32_4 = arith.constant 8 : i32
    %20 = vector.broadcast %c8_i32_4 : i32 to vector<1x256xi32>
    %21 = arith.cmpi slt, %19, %20 : vector<1x256xi32>
    %22 = arith.andi %17, %21 : vector<1x256xi1>
    %c-1_i32_5 = arith.constant -1 : i32
    %23 = vector.broadcast %c-1_i32_5 : i32 to vector<1x256xi32>
    %24 = arith.addi %9, %23 : vector<1x256xi32>
    %c0_i32_6 = arith.constant 0 : i32
    %25 = vector.broadcast %c0_i32_6 : i32 to vector<1x256xi32>
    %26 = arith.cmpi sge, %24, %25 : vector<1x256xi32>
    %27 = arith.andi %22, %26 : vector<1x256xi1>
    %c-1_i32_7 = arith.constant -1 : i32
    %28 = vector.broadcast %c-1_i32_7 : i32 to vector<1x256xi32>
    %29 = arith.addi %9, %28 : vector<1x256xi32>
    %c8_i32_8 = arith.constant 8 : i32
    %30 = vector.broadcast %c8_i32_8 : i32 to vector<1x256xi32>
    %31 = arith.cmpi slt, %29, %30 : vector<1x256xi32>
    %32 = arith.andi %27, %31 : vector<1x256xi1>
    %33 = arith.andi %32, %11 : vector<1x256xi1>
    %cst_9 = arith.constant 0.000000e+00 : f32
    %34 = vector.shape_cast %33 : vector<1x256xi1> to vector<1x256xi1>
    %35 = vector.broadcast %34 : vector<1x256xi1> to vector<8x256xi1>
    %36 = vector.broadcast %cst_9 : f32 to vector<8x256xf32>
    %37 = arith.select %35, %13, %36 : vector<8x256xi1>, vector<8x256xf32>
    %38 = vector.extract_strided_slice %2 {offsets = [8, 0], sizes = [8, 256], strides = [1, 1]} : vector<72x256xf32> to vector<8x256xf32>
    %c8_i32_10 = arith.constant 8 : i32
    %39 = tpu.dynamic_rotate %38 by %c8_i32_10 dim 1 : vector<8x256xf32>, i32 -> vector<8x256xf32>
    %c-1_i32_11 = arith.constant -1 : i32
    %40 = vector.broadcast %c-1_i32_11 : i32 to vector<1x256xi32>
    %41 = arith.addi %7, %40 : vector<1x256xi32>
    %c0_i32_12 = arith.constant 0 : i32
    %42 = vector.broadcast %c0_i32_12 : i32 to vector<1x256xi32>
    %43 = arith.cmpi sge, %41, %42 : vector<1x256xi32>
    %c-1_i32_13 = arith.constant -1 : i32
    %44 = vector.broadcast %c-1_i32_13 : i32 to vector<1x256xi32>
    %45 = arith.addi %7, %44 : vector<1x256xi32>
    %c8_i32_14 = arith.constant 8 : i32
    %46 = vector.broadcast %c8_i32_14 : i32 to vector<1x256xi32>
    %47 = arith.cmpi slt, %45, %46 : vector<1x256xi32>
    %48 = arith.andi %43, %47 : vector<1x256xi1>
    %c0_i32_15 = arith.constant 0 : i32
    %49 = vector.broadcast %c0_i32_15 : i32 to vector<1x256xi32>
    %50 = arith.addi %9, %49 : vector<1x256xi32>
    %c0_i32_16 = arith.constant 0 : i32
    %51 = vector.broadcast %c0_i32_16 : i32 to vector<1x256xi32>
    %52 = arith.cmpi sge, %50, %51 : vector<1x256xi32>
    %53 = arith.andi %48, %52 : vector<1x256xi1>
    %c0_i32_17 = arith.constant 0 : i32
    %54 = vector.broadcast %c0_i32_17 : i32 to vector<1x256xi32>
    %55 = arith.addi %9, %54 : vector<1x256xi32>
    %c8_i32_18 = arith.constant 8 : i32
    %56 = vector.broadcast %c8_i32_18 : i32 to vector<1x256xi32>
    %57 = arith.cmpi slt, %55, %56 : vector<1x256xi32>
    %58 = arith.andi %53, %57 : vector<1x256xi1>
    %59 = arith.andi %58, %11 : vector<1x256xi1>
    %cst_19 = arith.constant 0.000000e+00 : f32
    %60 = vector.shape_cast %59 : vector<1x256xi1> to vector<1x256xi1>
    %61 = vector.broadcast %60 : vector<1x256xi1> to vector<8x256xi1>
    %62 = vector.broadcast %cst_19 : f32 to vector<8x256xf32>
    %63 = arith.select %61, %39, %62 : vector<8x256xi1>, vector<8x256xf32>
    %64 = arith.addf %37, %63 : vector<8x256xf32>
    %65 = vector.extract_strided_slice %2 {offsets = [16, 0], sizes = [8, 256], strides = [1, 1]} : vector<72x256xf32> to vector<8x256xf32>
    %c7_i32_20 = arith.constant 7 : i32
    %66 = tpu.dynamic_rotate %65 by %c7_i32_20 dim 1 : vector<8x256xf32>, i32 -> vector<8x256xf32>
    %c-1_i32_21 = arith.constant -1 : i32
    %67 = vector.broadcast %c-1_i32_21 : i32 to vector<1x256xi32>
    %68 = arith.addi %7, %67 : vector<1x256xi32>
    %c0_i32_22 = arith.constant 0 : i32
    %69 = vector.broadcast %c0_i32_22 : i32 to vector<1x256xi32>
    %70 = arith.cmpi sge, %68, %69 : vector<1x256xi32>
    %c-1_i32_23 = arith.constant -1 : i32
    %71 = vector.broadcast %c-1_i32_23 : i32 to vector<1x256xi32>
    %72 = arith.addi %7, %71 : vector<1x256xi32>
    %c8_i32_24 = arith.constant 8 : i32
    %73 = vector.broadcast %c8_i32_24 : i32 to vector<1x256xi32>
    %74 = arith.cmpi slt, %72, %73 : vector<1x256xi32>
    %75 = arith.andi %70, %74 : vector<1x256xi1>
    %c1_i32 = arith.constant 1 : i32
    %76 = vector.broadcast %c1_i32 : i32 to vector<1x256xi32>
    %77 = arith.addi %9, %76 : vector<1x256xi32>
    %c0_i32_25 = arith.constant 0 : i32
    %78 = vector.broadcast %c0_i32_25 : i32 to vector<1x256xi32>
    %79 = arith.cmpi sge, %77, %78 : vector<1x256xi32>
    %80 = arith.andi %75, %79 : vector<1x256xi1>
    %c1_i32_26 = arith.constant 1 : i32
    %81 = vector.broadcast %c1_i32_26 : i32 to vector<1x256xi32>
    %82 = arith.addi %9, %81 : vector<1x256xi32>
    %c8_i32_27 = arith.constant 8 : i32
    %83 = vector.broadcast %c8_i32_27 : i32 to vector<1x256xi32>
    %84 = arith.cmpi slt, %82, %83 : vector<1x256xi32>
    %85 = arith.andi %80, %84 : vector<1x256xi1>
    %86 = arith.andi %85, %11 : vector<1x256xi1>
    %cst_28 = arith.constant 0.000000e+00 : f32
    %87 = vector.shape_cast %86 : vector<1x256xi1> to vector<1x256xi1>
    %88 = vector.broadcast %87 : vector<1x256xi1> to vector<8x256xi1>
    %89 = vector.broadcast %cst_28 : f32 to vector<8x256xf32>
    %90 = arith.select %88, %66, %89 : vector<8x256xi1>, vector<8x256xf32>
    %91 = arith.addf %64, %90 : vector<8x256xf32>
    %92 = vector.extract_strided_slice %2 {offsets = [24, 0], sizes = [8, 256], strides = [1, 1]} : vector<72x256xf32> to vector<8x256xf32>
    %c1_i32_29 = arith.constant 1 : i32
    %93 = tpu.dynamic_rotate %92 by %c1_i32_29 dim 1 : vector<8x256xf32>, i32 -> vector<8x256xf32>
    %c0_i32_30 = arith.constant 0 : i32
    %94 = vector.broadcast %c0_i32_30 : i32 to vector<1x256xi32>
    %95 = arith.addi %7, %94 : vector<1x256xi32>
    %c0_i32_31 = arith.constant 0 : i32
    %96 = vector.broadcast %c0_i32_31 : i32 to vector<1x256xi32>
    %97 = arith.cmpi sge, %95, %96 : vector<1x256xi32>
    %c0_i32_32 = arith.constant 0 : i32
    %98 = vector.broadcast %c0_i32_32 : i32 to vector<1x256xi32>
    %99 = arith.addi %7, %98 : vector<1x256xi32>
    %c8_i32_33 = arith.constant 8 : i32
    %100 = vector.broadcast %c8_i32_33 : i32 to vector<1x256xi32>
    %101 = arith.cmpi slt, %99, %100 : vector<1x256xi32>
    %102 = arith.andi %97, %101 : vector<1x256xi1>
    %c-1_i32_34 = arith.constant -1 : i32
    %103 = vector.broadcast %c-1_i32_34 : i32 to vector<1x256xi32>
    %104 = arith.addi %9, %103 : vector<1x256xi32>
    %c0_i32_35 = arith.constant 0 : i32
    %105 = vector.broadcast %c0_i32_35 : i32 to vector<1x256xi32>
    %106 = arith.cmpi sge, %104, %105 : vector<1x256xi32>
    %107 = arith.andi %102, %106 : vector<1x256xi1>
    %c-1_i32_36 = arith.constant -1 : i32
    %108 = vector.broadcast %c-1_i32_36 : i32 to vector<1x256xi32>
    %109 = arith.addi %9, %108 : vector<1x256xi32>
    %c8_i32_37 = arith.constant 8 : i32
    %110 = vector.broadcast %c8_i32_37 : i32 to vector<1x256xi32>
    %111 = arith.cmpi slt, %109, %110 : vector<1x256xi32>
    %112 = arith.andi %107, %111 : vector<1x256xi1>
    %113 = arith.andi %112, %11 : vector<1x256xi1>
    %cst_38 = arith.constant 0.000000e+00 : f32
    %114 = vector.shape_cast %113 : vector<1x256xi1> to vector<1x256xi1>
    %115 = vector.broadcast %114 : vector<1x256xi1> to vector<8x256xi1>
    %116 = vector.broadcast %cst_38 : f32 to vector<8x256xf32>
    %117 = arith.select %115, %93, %116 : vector<8x256xi1>, vector<8x256xf32>
    %118 = arith.addf %91, %117 : vector<8x256xf32>
    %119 = vector.extract_strided_slice %2 {offsets = [32, 0], sizes = [8, 256], strides = [1, 1]} : vector<72x256xf32> to vector<8x256xf32>
    %c0_i32_39 = arith.constant 0 : i32
    %120 = vector.broadcast %c0_i32_39 : i32 to vector<1x256xi32>
    %121 = arith.addi %7, %120 : vector<1x256xi32>
    %c0_i32_40 = arith.constant 0 : i32
    %122 = vector.broadcast %c0_i32_40 : i32 to vector<1x256xi32>
    %123 = arith.cmpi sge, %121, %122 : vector<1x256xi32>
    %c0_i32_41 = arith.constant 0 : i32
    %124 = vector.broadcast %c0_i32_41 : i32 to vector<1x256xi32>
    %125 = arith.addi %7, %124 : vector<1x256xi32>
    %c8_i32_42 = arith.constant 8 : i32
    %126 = vector.broadcast %c8_i32_42 : i32 to vector<1x256xi32>
    %127 = arith.cmpi slt, %125, %126 : vector<1x256xi32>
    %128 = arith.andi %123, %127 : vector<1x256xi1>
    %c0_i32_43 = arith.constant 0 : i32
    %129 = vector.broadcast %c0_i32_43 : i32 to vector<1x256xi32>
    %130 = arith.addi %9, %129 : vector<1x256xi32>
    %c0_i32_44 = arith.constant 0 : i32
    %131 = vector.broadcast %c0_i32_44 : i32 to vector<1x256xi32>
    %132 = arith.cmpi sge, %130, %131 : vector<1x256xi32>
    %133 = arith.andi %128, %132 : vector<1x256xi1>
    %c0_i32_45 = arith.constant 0 : i32
    %134 = vector.broadcast %c0_i32_45 : i32 to vector<1x256xi32>
    %135 = arith.addi %9, %134 : vector<1x256xi32>
    %c8_i32_46 = arith.constant 8 : i32
    %136 = vector.broadcast %c8_i32_46 : i32 to vector<1x256xi32>
    %137 = arith.cmpi slt, %135, %136 : vector<1x256xi32>
    %138 = arith.andi %133, %137 : vector<1x256xi1>
    %139 = arith.andi %138, %11 : vector<1x256xi1>
    %cst_47 = arith.constant 0.000000e+00 : f32
    %140 = vector.shape_cast %139 : vector<1x256xi1> to vector<1x256xi1>
    %141 = vector.broadcast %140 : vector<1x256xi1> to vector<8x256xi1>
    %142 = vector.broadcast %cst_47 : f32 to vector<8x256xf32>
    %143 = arith.select %141, %119, %142 : vector<8x256xi1>, vector<8x256xf32>
    %144 = arith.addf %118, %143 : vector<8x256xf32>
    %145 = vector.extract_strided_slice %2 {offsets = [40, 0], sizes = [8, 256], strides = [1, 1]} : vector<72x256xf32> to vector<8x256xf32>
    %c255_i32 = arith.constant 255 : i32
    %146 = tpu.dynamic_rotate %145 by %c255_i32 dim 1 : vector<8x256xf32>, i32 -> vector<8x256xf32>
    %c0_i32_48 = arith.constant 0 : i32
    %147 = vector.broadcast %c0_i32_48 : i32 to vector<1x256xi32>
    %148 = arith.addi %7, %147 : vector<1x256xi32>
    %c0_i32_49 = arith.constant 0 : i32
    %149 = vector.broadcast %c0_i32_49 : i32 to vector<1x256xi32>
    %150 = arith.cmpi sge, %148, %149 : vector<1x256xi32>
    %c0_i32_50 = arith.constant 0 : i32
    %151 = vector.broadcast %c0_i32_50 : i32 to vector<1x256xi32>
    %152 = arith.addi %7, %151 : vector<1x256xi32>
    %c8_i32_51 = arith.constant 8 : i32
    %153 = vector.broadcast %c8_i32_51 : i32 to vector<1x256xi32>
    %154 = arith.cmpi slt, %152, %153 : vector<1x256xi32>
    %155 = arith.andi %150, %154 : vector<1x256xi1>
    %c1_i32_52 = arith.constant 1 : i32
    %156 = vector.broadcast %c1_i32_52 : i32 to vector<1x256xi32>
    %157 = arith.addi %9, %156 : vector<1x256xi32>
    %c0_i32_53 = arith.constant 0 : i32
    %158 = vector.broadcast %c0_i32_53 : i32 to vector<1x256xi32>
    %159 = arith.cmpi sge, %157, %158 : vector<1x256xi32>
    %160 = arith.andi %155, %159 : vector<1x256xi1>
    %c1_i32_54 = arith.constant 1 : i32
    %161 = vector.broadcast %c1_i32_54 : i32 to vector<1x256xi32>
    %162 = arith.addi %9, %161 : vector<1x256xi32>
    %c8_i32_55 = arith.constant 8 : i32
    %163 = vector.broadcast %c8_i32_55 : i32 to vector<1x256xi32>
    %164 = arith.cmpi slt, %162, %163 : vector<1x256xi32>
    %165 = arith.andi %160, %164 : vector<1x256xi1>
    %166 = arith.andi %165, %11 : vector<1x256xi1>
    %cst_56 = arith.constant 0.000000e+00 : f32
    %167 = vector.shape_cast %166 : vector<1x256xi1> to vector<1x256xi1>
    %168 = vector.broadcast %167 : vector<1x256xi1> to vector<8x256xi1>
    %169 = vector.broadcast %cst_56 : f32 to vector<8x256xf32>
    %170 = arith.select %168, %146, %169 : vector<8x256xi1>, vector<8x256xf32>
    %171 = arith.addf %144, %170 : vector<8x256xf32>
    %172 = vector.extract_strided_slice %2 {offsets = [48, 0], sizes = [8, 256], strides = [1, 1]} : vector<72x256xf32> to vector<8x256xf32>
    %c249_i32 = arith.constant 249 : i32
    %173 = tpu.dynamic_rotate %172 by %c249_i32 dim 1 : vector<8x256xf32>, i32 -> vector<8x256xf32>
    %c1_i32_57 = arith.constant 1 : i32
    %174 = vector.broadcast %c1_i32_57 : i32 to vector<1x256xi32>
    %175 = arith.addi %7, %174 : vector<1x256xi32>
    %c0_i32_58 = arith.constant 0 : i32
    %176 = vector.broadcast %c0_i32_58 : i32 to vector<1x256xi32>
    %177 = arith.cmpi sge, %175, %176 : vector<1x256xi32>
    %c1_i32_59 = arith.constant 1 : i32
    %178 = vector.broadcast %c1_i32_59 : i32 to vector<1x256xi32>
    %179 = arith.addi %7, %178 : vector<1x256xi32>
    %c8_i32_60 = arith.constant 8 : i32
    %180 = vector.broadcast %c8_i32_60 : i32 to vector<1x256xi32>
    %181 = arith.cmpi slt, %179, %180 : vector<1x256xi32>
    %182 = arith.andi %177, %181 : vector<1x256xi1>
    %c-1_i32_61 = arith.constant -1 : i32
    %183 = vector.broadcast %c-1_i32_61 : i32 to vector<1x256xi32>
    %184 = arith.addi %9, %183 : vector<1x256xi32>
    %c0_i32_62 = arith.constant 0 : i32
    %185 = vector.broadcast %c0_i32_62 : i32 to vector<1x256xi32>
    %186 = arith.cmpi sge, %184, %185 : vector<1x256xi32>
    %187 = arith.andi %182, %186 : vector<1x256xi1>
    %c-1_i32_63 = arith.constant -1 : i32
    %188 = vector.broadcast %c-1_i32_63 : i32 to vector<1x256xi32>
    %189 = arith.addi %9, %188 : vector<1x256xi32>
    %c8_i32_64 = arith.constant 8 : i32
    %190 = vector.broadcast %c8_i32_64 : i32 to vector<1x256xi32>
    %191 = arith.cmpi slt, %189, %190 : vector<1x256xi32>
    %192 = arith.andi %187, %191 : vector<1x256xi1>
    %193 = arith.andi %192, %11 : vector<1x256xi1>
    %cst_65 = arith.constant 0.000000e+00 : f32
    %194 = vector.shape_cast %193 : vector<1x256xi1> to vector<1x256xi1>
    %195 = vector.broadcast %194 : vector<1x256xi1> to vector<8x256xi1>
    %196 = vector.broadcast %cst_65 : f32 to vector<8x256xf32>
    %197 = arith.select %195, %173, %196 : vector<8x256xi1>, vector<8x256xf32>
    %198 = arith.addf %171, %197 : vector<8x256xf32>
    %199 = vector.extract_strided_slice %2 {offsets = [56, 0], sizes = [8, 256], strides = [1, 1]} : vector<72x256xf32> to vector<8x256xf32>
    %c248_i32 = arith.constant 248 : i32
    %200 = tpu.dynamic_rotate %199 by %c248_i32 dim 1 : vector<8x256xf32>, i32 -> vector<8x256xf32>
    %c1_i32_66 = arith.constant 1 : i32
    %201 = vector.broadcast %c1_i32_66 : i32 to vector<1x256xi32>
    %202 = arith.addi %7, %201 : vector<1x256xi32>
    %c0_i32_67 = arith.constant 0 : i32
    %203 = vector.broadcast %c0_i32_67 : i32 to vector<1x256xi32>
    %204 = arith.cmpi sge, %202, %203 : vector<1x256xi32>
    %c1_i32_68 = arith.constant 1 : i32
    %205 = vector.broadcast %c1_i32_68 : i32 to vector<1x256xi32>
    %206 = arith.addi %7, %205 : vector<1x256xi32>
    %c8_i32_69 = arith.constant 8 : i32
    %207 = vector.broadcast %c8_i32_69 : i32 to vector<1x256xi32>
    %208 = arith.cmpi slt, %206, %207 : vector<1x256xi32>
    %209 = arith.andi %204, %208 : vector<1x256xi1>
    %c0_i32_70 = arith.constant 0 : i32
    %210 = vector.broadcast %c0_i32_70 : i32 to vector<1x256xi32>
    %211 = arith.addi %9, %210 : vector<1x256xi32>
    %c0_i32_71 = arith.constant 0 : i32
    %212 = vector.broadcast %c0_i32_71 : i32 to vector<1x256xi32>
    %213 = arith.cmpi sge, %211, %212 : vector<1x256xi32>
    %214 = arith.andi %209, %213 : vector<1x256xi1>
    %c0_i32_72 = arith.constant 0 : i32
    %215 = vector.broadcast %c0_i32_72 : i32 to vector<1x256xi32>
    %216 = arith.addi %9, %215 : vector<1x256xi32>
    %c8_i32_73 = arith.constant 8 : i32
    %217 = vector.broadcast %c8_i32_73 : i32 to vector<1x256xi32>
    %218 = arith.cmpi slt, %216, %217 : vector<1x256xi32>
    %219 = arith.andi %214, %218 : vector<1x256xi1>
    %220 = arith.andi %219, %11 : vector<1x256xi1>
    %cst_74 = arith.constant 0.000000e+00 : f32
    %221 = vector.shape_cast %220 : vector<1x256xi1> to vector<1x256xi1>
    %222 = vector.broadcast %221 : vector<1x256xi1> to vector<8x256xi1>
    %223 = vector.broadcast %cst_74 : f32 to vector<8x256xf32>
    %224 = arith.select %222, %200, %223 : vector<8x256xi1>, vector<8x256xf32>
    %225 = arith.addf %198, %224 : vector<8x256xf32>
    %226 = vector.extract_strided_slice %2 {offsets = [64, 0], sizes = [8, 256], strides = [1, 1]} : vector<72x256xf32> to vector<8x256xf32>
    %c247_i32 = arith.constant 247 : i32
    %227 = tpu.dynamic_rotate %226 by %c247_i32 dim 1 : vector<8x256xf32>, i32 -> vector<8x256xf32>
    %c1_i32_75 = arith.constant 1 : i32
    %228 = vector.broadcast %c1_i32_75 : i32 to vector<1x256xi32>
    %229 = arith.addi %7, %228 : vector<1x256xi32>
    %c0_i32_76 = arith.constant 0 : i32
    %230 = vector.broadcast %c0_i32_76 : i32 to vector<1x256xi32>
    %231 = arith.cmpi sge, %229, %230 : vector<1x256xi32>
    %c1_i32_77 = arith.constant 1 : i32
    %232 = vector.broadcast %c1_i32_77 : i32 to vector<1x256xi32>
    %233 = arith.addi %7, %232 : vector<1x256xi32>
    %c8_i32_78 = arith.constant 8 : i32
    %234 = vector.broadcast %c8_i32_78 : i32 to vector<1x256xi32>
    %235 = arith.cmpi slt, %233, %234 : vector<1x256xi32>
    %236 = arith.andi %231, %235 : vector<1x256xi1>
    %c1_i32_79 = arith.constant 1 : i32
    %237 = vector.broadcast %c1_i32_79 : i32 to vector<1x256xi32>
    %238 = arith.addi %9, %237 : vector<1x256xi32>
    %c0_i32_80 = arith.constant 0 : i32
    %239 = vector.broadcast %c0_i32_80 : i32 to vector<1x256xi32>
    %240 = arith.cmpi sge, %238, %239 : vector<1x256xi32>
    %241 = arith.andi %236, %240 : vector<1x256xi1>
    %c1_i32_81 = arith.constant 1 : i32
    %242 = vector.broadcast %c1_i32_81 : i32 to vector<1x256xi32>
    %243 = arith.addi %9, %242 : vector<1x256xi32>
    %c8_i32_82 = arith.constant 8 : i32
    %244 = vector.broadcast %c8_i32_82 : i32 to vector<1x256xi32>
    %245 = arith.cmpi slt, %243, %244 : vector<1x256xi32>
    %246 = arith.andi %241, %245 : vector<1x256xi1>
    %247 = arith.andi %246, %11 : vector<1x256xi1>
    %cst_83 = arith.constant 0.000000e+00 : f32
    %248 = vector.shape_cast %247 : vector<1x256xi1> to vector<1x256xi1>
    %249 = vector.broadcast %248 : vector<1x256xi1> to vector<8x256xi1>
    %250 = vector.broadcast %cst_83 : f32 to vector<8x256xf32>
    %251 = arith.select %249, %227, %250 : vector<8x256xi1>, vector<8x256xf32>
    %252 = arith.addf %225, %251 : vector<8x256xf32>
    %253 = vector.extract_strided_slice %252 {offsets = [0, 0], sizes = [4, 256], strides = [1, 1]} : vector<8x256xf32> to vector<4x256xf32>
    %c0_84 = arith.constant 0 : index
    %c0_85 = arith.constant 0 : index
    %254 = vector.load %arg3[%c0_84, %c0_85] : memref<4x4xf32, #tpu.memory_space<vmem>>, vector<4x1xf32>
    %255 = vector.broadcast %254 : vector<4x1xf32> to vector<4x256xf32>
    %256 = arith.addf %253, %255 : vector<4x256xf32>
    %cst_86 = arith.constant 0.000000e+00 : f32
    %257 = vector.broadcast %cst_86 : f32 to vector<4x256xf32>
    %258 = arith.maximumf %256, %257 : vector<4x256xf32>
    %cst_87 = arith.constant 0.000000e+00 : f32
    %259 = vector.shape_cast %11 : vector<1x256xi1> to vector<1x256xi1>
    %260 = vector.broadcast %259 : vector<1x256xi1> to vector<4x256xi1>
    %261 = vector.broadcast %cst_87 : f32 to vector<4x256xf32>
    %262 = arith.select %260, %258, %261 : vector<4x256xi1>, vector<4x256xf32>
    %cst_88 = arith.constant dense<0.000000e+00> : vector<4xf32>
    %263 = vector.multi_reduction <add>, %262, %cst_88 [1] : vector<4x256xf32> to vector<4xf32>
    %264 = vector.shape_cast %263 : vector<4xf32> to vector<4x1xf32>
    %cst_89 = arith.constant 7.812500e-03 : f32
    %265 = vector.broadcast %cst_89 : f32 to vector<4x1xf32>
    %266 = arith.mulf %264, %265 : vector<4x1xf32>
    %267 = vector.broadcast %266 : vector<4x1xf32> to vector<4x256xf32>
    %268 = arith.subf %262, %267 : vector<4x256xf32>
    %cst_90 = arith.constant 0.000000e+00 : f32
    %269 = vector.shape_cast %11 : vector<1x256xi1> to vector<1x256xi1>
    %270 = vector.broadcast %269 : vector<1x256xi1> to vector<4x256xi1>
    %271 = vector.broadcast %cst_90 : f32 to vector<4x256xf32>
    %272 = arith.select %270, %268, %271 : vector<4x256xi1>, vector<4x256xf32>
    %273 = arith.mulf %272, %272 : vector<4x256xf32>
    %cst_91 = arith.constant dense<0.000000e+00> : vector<4xf32>
    %274 = vector.multi_reduction <add>, %273, %cst_91 [1] : vector<4x256xf32> to vector<4xf32>
    %275 = vector.shape_cast %274 : vector<4xf32> to vector<4x1xf32>
    %cst_92 = arith.constant 7.812500e-03 : f32
    %276 = vector.broadcast %cst_92 : f32 to vector<4x1xf32>
    %277 = arith.mulf %275, %276 : vector<4x1xf32>
    %cst_93 = arith.constant 9.99999974E-6 : f32
    %278 = vector.broadcast %cst_93 : f32 to vector<4x1xf32>
    %279 = arith.addf %277, %278 : vector<4x1xf32>
    %280 = math.rsqrt %279 : vector<4x1xf32>
    %281 = vector.broadcast %280 : vector<4x1xf32> to vector<4x256xf32>
    %282 = arith.mulf %272, %281 : vector<4x256xf32>
    %c0_94 = arith.constant 0 : index
    %c1 = arith.constant 1 : index
    %283 = vector.load %arg3[%c0_94, %c1] : memref<4x4xf32, #tpu.memory_space<vmem>>, vector<4x1xf32>
    %284 = vector.broadcast %283 : vector<4x1xf32> to vector<4x256xf32>
    %285 = arith.mulf %282, %284 : vector<4x256xf32>
    %c0_95 = arith.constant 0 : index
    %c2 = arith.constant 2 : index
    %286 = vector.load %arg3[%c0_95, %c2] : memref<4x4xf32, #tpu.memory_space<vmem>>, vector<4x1xf32>
    %287 = vector.broadcast %286 : vector<4x1xf32> to vector<4x256xf32>
    %288 = arith.addf %285, %287 : vector<4x256xf32>
    %c0_96 = arith.constant 0 : index
    %c0_97 = arith.constant 0 : index
    %289 = vector.load %arg2[%c0_96, %c0_97] : memref<128x512xf32, #tpu.memory_space<vmem>>, vector<128x512xf32>
    %290 = vector.extract_strided_slice %288 {offsets = [0, 0], sizes = [4, 128], strides = [1, 1]} : vector<4x256xf32> to vector<4x128xf32>
    %cst_98 = arith.constant dense<0.000000e+00> : vector<4x512xf32>
    %291 = tpu.matmul %290, %289, %cst_98 {dimension_numbers = #tpu.dot_dimension_numbers<[1], [0], [0], [1], [0, 0, 1, 1], [], []>} : vector<4x128xf32>, vector<128x512xf32>, vector<4x512xf32> -> vector<4x512xf32>
    %292 = vector.extract_strided_slice %291 {offsets = [0, 0], sizes = [1, 128], strides = [1, 1]} : vector<4x512xf32> to vector<1x128xf32>
    %293 = vector.extract_strided_slice %291 {offsets = [1, 128], sizes = [1, 128], strides = [1, 1]} : vector<4x512xf32> to vector<1x128xf32>
    %294 = arith.addf %292, %293 : vector<1x128xf32>
    %295 = vector.extract_strided_slice %291 {offsets = [2, 256], sizes = [1, 128], strides = [1, 1]} : vector<4x512xf32> to vector<1x128xf32>
    %296 = arith.addf %294, %295 : vector<1x128xf32>
    %297 = vector.extract_strided_slice %291 {offsets = [3, 384], sizes = [1, 128], strides = [1, 1]} : vector<4x512xf32> to vector<1x128xf32>
    %298 = arith.addf %296, %297 : vector<1x128xf32>
    %299 = vector.extract_strided_slice %288 {offsets = [0, 128], sizes = [4, 128], strides = [1, 1]} : vector<4x256xf32> to vector<4x128xf32>
    %cst_99 = arith.constant dense<0.000000e+00> : vector<4x512xf32>
    %300 = tpu.matmul %299, %289, %cst_99 {dimension_numbers = #tpu.dot_dimension_numbers<[1], [0], [0], [1], [0, 0, 1, 1], [], []>} : vector<4x128xf32>, vector<128x512xf32>, vector<4x512xf32> -> vector<4x512xf32>
    %301 = vector.extract_strided_slice %300 {offsets = [0, 0], sizes = [1, 128], strides = [1, 1]} : vector<4x512xf32> to vector<1x128xf32>
    %302 = vector.extract_strided_slice %300 {offsets = [1, 128], sizes = [1, 128], strides = [1, 1]} : vector<4x512xf32> to vector<1x128xf32>
    %303 = arith.addf %301, %302 : vector<1x128xf32>
    %304 = vector.extract_strided_slice %300 {offsets = [2, 256], sizes = [1, 128], strides = [1, 1]} : vector<4x512xf32> to vector<1x128xf32>
    %305 = arith.addf %303, %304 : vector<1x128xf32>
    %306 = vector.extract_strided_slice %300 {offsets = [3, 384], sizes = [1, 128], strides = [1, 1]} : vector<4x512xf32> to vector<1x128xf32>
    %307 = arith.addf %305, %306 : vector<1x128xf32>
    %308 = tpu.concatenate %298, %307 in 0 : vector<1x128xf32>, vector<1x128xf32> -> vector<2x128xf32>
    %309 = vector.extract_strided_slice %308 {offsets = [0, 0], sizes = [2, 64], strides = [1, 1]} : vector<2x128xf32> to vector<2x64xf32>
    %c0_100 = arith.constant 0 : index
    %c0_101 = arith.constant 0 : index
    %310 = vector.load %arg4[%c0_100, %c0_101] : memref<4x64xf32, #tpu.memory_space<vmem>>, vector<1x64xf32>
    %311 = vector.broadcast %310 : vector<1x64xf32> to vector<2x64xf32>
    %312 = arith.addf %309, %311 : vector<2x64xf32>
    %cst_102 = arith.constant dense<0xFF800000> : vector<2xf32>
    %313 = vector.multi_reduction <maximumf>, %312, %cst_102 [1] : vector<2x64xf32> to vector<2xf32>
    %314 = vector.shape_cast %313 : vector<2xf32> to vector<2x1xf32>
    %315 = vector.broadcast %314 : vector<2x1xf32> to vector<2x64xf32>
    %316 = arith.subf %312, %315 : vector<2x64xf32>
    %317 = math.exp %316 : vector<2x64xf32>
    %cst_103 = arith.constant dense<0.000000e+00> : vector<2xf32>
    %318 = vector.multi_reduction <add>, %317, %cst_103 [1] : vector<2x64xf32> to vector<2xf32>
    %319 = vector.shape_cast %318 : vector<2xf32> to vector<2x1xf32>
    %320 = vector.broadcast %319 : vector<2x1xf32> to vector<2x64xf32>
    %321 = arith.divf %317, %320 : vector<2x64xf32>
    %322 = vector.extract_strided_slice %308 {offsets = [0, 64], sizes = [2, 64], strides = [1, 1]} : vector<2x128xf32> to vector<2x64xf32>
    %c1_104 = arith.constant 1 : index
    %c0_105 = arith.constant 0 : index
    %323 = vector.load %arg4[%c1_104, %c0_105] : memref<4x64xf32, #tpu.memory_space<vmem>>, vector<1x64xf32>
    %324 = vector.broadcast %323 : vector<1x64xf32> to vector<2x64xf32>
    %325 = arith.addf %322, %324 : vector<2x64xf32>
    %cst_106 = arith.constant 0.000000e+00 : f32
    %326 = vector.broadcast %cst_106 : f32 to vector<2x64xf32>
    %327 = arith.maximumf %325, %326 : vector<2x64xf32>
    %c2_107 = arith.constant 2 : index
    %c0_108 = arith.constant 0 : index
    %328 = vector.load %arg4[%c2_107, %c0_108] : memref<4x64xf32, #tpu.memory_space<vmem>>, vector<1x64xf32>
    %329 = vector.broadcast %328 : vector<1x64xf32> to vector<2x64xf32>
    %330 = arith.mulf %327, %329 : vector<2x64xf32>
    %cst_109 = arith.constant dense<0.000000e+00> : vector<2xf32>
    %331 = vector.multi_reduction <add>, %330, %cst_109 [1] : vector<2x64xf32> to vector<2xf32>
    %332 = vector.shape_cast %331 : vector<2xf32> to vector<2x1xf32>
    %c3 = arith.constant 3 : index
    %c0_110 = arith.constant 0 : index
    %333 = vector.load %arg4[%c3, %c0_110] : memref<4x64xf32, #tpu.memory_space<vmem>>, vector<1x1xf32>
    %334 = vector.broadcast %333 : vector<1x1xf32> to vector<2x1xf32>
    %335 = arith.addf %332, %334 : vector<2x1xf32>
    %336 = math.tanh %335 : vector<2x1xf32>
    %337 = vector.shape_cast %336 : vector<2x1xf32> to vector<2x1xf32>
    %338 = vector.broadcast %337 : vector<2x1xf32> to vector<2x64xf32>
    %339 = tpu.concatenate %321, %338 in 1 : vector<2x64xf32>, vector<2x64xf32> -> vector<2x128xf32>
    %c0_111 = arith.constant 0 : index
    %c0_112 = arith.constant 0 : index
    %340 = vector.load %arg5[%c0_111, %c0_112] : memref<2x128xf32, #tpu.memory_space<vmem>>, vector<2x128xf32>
    tpu.vector_store %arg5[%c0_111, %c0_112], %339 {strides = array<i32>} : memref<2x128xf32, #tpu.memory_space<vmem>>, vector<2x128xf32>,
    return
  }
}

</mosaic_0001>

<llo_original>
// kernel: out_block_forward.1
$region0: #{out_block_forward.1}
  #allocation0 [shape = 'u32[]', space=smem, size = 0x4, offset = 0x4, fixed_abs, tag = 'smem constant byte address 0x4 - core index']
  #allocation1 [shape = 'u32[144,128]{1,0:T(1,128)}', space=vmem, size = 0x12000, scoped, tag = 'internal scratch']
  %s0 = inlined_call_operand.vmem [shape: bf16[256,256], index: 0, kind: input, shape index: {}]
  %s1 = inlined_call_operand.vmem [shape: bf16[72,256], index: 1, kind: input, shape index: {}]
  %s2 = inlined_call_operand.vmem [shape: f32[128,512], index: 2, kind: input, shape index: {}]
  %s3 = inlined_call_operand.vmem [shape: f32[4,4], index: 3, kind: input, shape index: {}]
  %s4 = inlined_call_operand.vmem [shape: f32[4,64], index: 4, kind: input, shape index: {}]
  %s5 = inlined_call_operand.vmem [shape: f32[2,128], index: 5, kind: output, shape index: {}]
  %s6 = sld [smem:[#allocation0]]
  $region30: #{out_block_forward.1} parent=0
    _
  %s8 = ssub.s32 1, %s6
  %s9 = scalar_select 0, %s8, %s6
  // Predicated region
  $region2: #{out_block_forward.1} parent=0 // pred_check
    _
  $region3: #{out_block_forward.1} parent=0 // pred_check_branch
    %11 = sbr.rel (0) target = $region5
  $region4: #{out_block_forward.1} parent=0 // pred_region
    _
  $region5: #{out_block_forward.1} parent=0 // pred_fallthru
    _
  // Predicated region
  $region6: #{out_block_forward.1} parent=0 // pred_check
    _
  $region7: #{out_block_forward.1} parent=0 // pred_check_branch
    %13 = sbr.rel (0) target = $region9
  $region8: #{out_block_forward.1} parent=0 // pred_region
    _
  $region9: #{out_block_forward.1} parent=0 // pred_fallthru
    _
  // Predicated region
  $region10: #{out_block_forward.1} parent=0 // pred_check
    _
  $region11: #{out_block_forward.1} parent=0 // pred_check_branch
    %15 = sbr.rel (0) target = $region13
  $region12: #{out_block_forward.1} parent=0 // pred_region
    _
  $region13: #{out_block_forward.1} parent=0 // pred_fallthru
    _
  // Predicated region
  $region14: #{out_block_forward.1} parent=0 // pred_check
    _
  $region15: #{out_block_forward.1} parent=0 // pred_check_branch
    %17 = sbr.rel (0) target = $region17
  $region16: #{out_block_forward.1} parent=0 // pred_region
    _
  $region17: #{out_block_forward.1} parent=0 // pred_fallthru
    _
  // Predicated region
  $region18: #{out_block_forward.1} parent=0 // pred_check
    _
  $region19: #{out_block_forward.1} parent=0 // pred_check_branch
    %19 = sbr.rel (0) target = $region21
  $region20: #{out_block_forward.1} parent=0 // pred_region
    _
  $region21: #{out_block_forward.1} parent=0 // pred_fallthru
    _
  %v20 = vld [vmem:[%s1] sm:$0xff]
  %v21 = vld [vmem:[%s1 + $0x8] sm:$0xff]
  %v22 = vld [vmem:[%s1 + $0x10] sm:$0xff]
  %v23 = vld [vmem:[%s1 + $0x18] sm:$0xff]
  %v24 = vld [vmem:[%s1 + $0x20] sm:$0xff]
  %v25 = vld [vmem:[%s1 + $0x28] sm:$0xff]
  %v26 = vld [vmem:[%s1 + $0x30] sm:$0xff]
  %v27 = vld [vmem:[%s1 + $0x38] sm:$0xff]
  %v28 = vld [vmem:[%s1 + $0x40] sm:$0xff]
  %v29 = vld [vmem:[%s0] sm:$0xff]
  %v30 = vld [vmem:[%s0 + $0x8] sm:$0xff]
  %v31 = vld [vmem:[%s0 + $0x10] sm:$0xff]
  %v32 = vld [vmem:[%s0 + $0x18] sm:$0xff]
  %v33 = vld [vmem:[%s0 + $0x20] sm:$0xff]
  %v34 = vld [vmem:[%s0 + $0x28] sm:$0xff]
  %v35 = vld [vmem:[%s0 + $0x30] sm:$0xff]
  %v36 = vld [vmem:[%s0 + $0x38] sm:$0xff]
  %v37 = vld [vmem:[%s0 + $0x40] sm:$0xff]
  %v38 = vld [vmem:[%s0 + $0x48] sm:$0xff]
  %v39 = vld [vmem:[%s0 + $0x50] sm:$0xff]
  %v40 = vld [vmem:[%s0 + $0x58] sm:$0xff]
  %v41 = vld [vmem:[%s0 + $0x60] sm:$0xff]
  %v42 = vld [vmem:[%s0 + $0x68] sm:$0xff]
  %v43 = vld [vmem:[%s0 + $0x70] sm:$0xff]
  %v44 = vld [vmem:[%s0 + $0x78] sm:$0xff]
  %v45 = vld [vmem:[%s0 + $0x80] sm:$0xff]
  %v46 = vld [vmem:[%s0 + $0x88] sm:$0xff]
  %v47 = vld [vmem:[%s0 + $0x90] sm:$0xff]
  %v48 = vld [vmem:[%s0 + $0x98] sm:$0xff]
  %v49 = vld [vmem:[%s0 + $0xa0] sm:$0xff]
  %v50 = vld [vmem:[%s0 + $0xa8] sm:$0xff]
  %v51 = vld [vmem:[%s0 + $0xb0] sm:$0xff]
  %v52 = vld [vmem:[%s0 + $0xb8] sm:$0xff]
  %v53 = vld [vmem:[%s0 + $0xc0] sm:$0xff]
  %v54 = vld [vmem:[%s0 + $0xc8] sm:$0xff]
  %v55 = vld [vmem:[%s0 + $0xd0] sm:$0xff]
  %v56 = vld [vmem:[%s0 + $0xd8] sm:$0xff]
  %v57 = vld [vmem:[%s0 + $0xe0] sm:$0xff]
  %v58 = vld [vmem:[%s0 + $0xe8] sm:$0xff]
  %v59 = vld [vmem:[%s0 + $0xf0] sm:$0xff]
  %v60 = vld [vmem:[%s0 + $0xf8] sm:$0xff]
  %v70 = vunpack.c.l.b16 %v20
  %v71 = vunpack.c.h.b16 %v20
  %v72 = vunpack.c.l.b16 %v21
  %v73 = vunpack.c.h.b16 %v21
  %v74 = vunpack.c.l.b16 %v22
  %v75 = vunpack.c.h.b16 %v22
  %v76 = vunpack.c.l.b16 %v23
  %v77 = vunpack.c.h.b16 %v23
  %v78 = vunpack.c.l.b16 %v24
  %v79 = vunpack.c.h.b16 %v24
  %v80 = vunpack.c.l.b16 %v25
  %v81 = vunpack.c.h.b16 %v25
  %v82 = vunpack.c.l.b16 %v26
  %v83 = vunpack.c.h.b16 %v26
  %v84 = vunpack.c.l.b16 %v27
  %v85 = vunpack.c.h.b16 %v27
  %v86 = vunpack.c.l.b16 %v28
  %v87 = vunpack.c.h.b16 %v28
  %v88 = vpack.c.b16 %v72, %v70
  %v89 = vpack.c.b16 %v73, %v71
  %v90 = vpack.c.b16 %v76, %v74
  %v91 = vpack.c.b16 %v77, %v75
  %v92 = vpack.c.b16 %v80, %v78
  %v93 = vpack.c.b16 %v81, %v79
  %v94 = vpack.c.b16 %v84, %v82
  %v95 = vpack.c.b16 %v85, %v83
  %v96 = vpack.c.b16 %v86, %v86
  %v97 = vpack.c.b16 %v87, %v87
  %v140 = vunpack.c.l.b16 %v29
  %v141 = vunpack.c.h.b16 %v29
  %v142 = vunpack.c.l.b16 %v30
  %v143 = vunpack.c.h.b16 %v30
  %v144 = vunpack.c.l.b16 %v31
  %v145 = vunpack.c.h.b16 %v31
  %v146 = vunpack.c.l.b16 %v32
  %v147 = vunpack.c.h.b16 %v32
  %v148 = vunpack.c.l.b16 %v33
  %v149 = vunpack.c.h.b16 %v33
  %v150 = vunpack.c.l.b16 %v34
  %v151 = vunpack.c.h.b16 %v34
  %v152 = vunpack.c.l.b16 %v35
  %v153 = vunpack.c.h.b16 %v35
  %v154 = vunpack.c.l.b16 %v36
  %v155 = vunpack.c.h.b16 %v36
  %v156 = vunpack.c.l.b16 %v37
  %v157 = vunpack.c.h.b16 %v37
  %v158 = vunpack.c.l.b16 %v38
  %v159 = vunpack.c.h.b16 %v38
  %v160 = vunpack.c.l.b16 %v39
  %v161 = vunpack.c.h.b16 %v39
  %v162 = vunpack.c.l.b16 %v40
  %v163 = vunpack.c.h.b16 %v40
  %v164 = vunpack.c.l.b16 %v41
  %v165 = vunpack.c.h.b16 %v41
  %v166 = vunpack.c.l.b16 %v42
  %v167 = vunpack.c.h.b16 %v42
  %v168 = vunpack.c.l.b16 %v43
  %v169 = vunpack.c.h.b16 %v43
  %v170 = vunpack.c.l.b16 %v44
  %v171 = vunpack.c.h.b16 %v44
  %v172 = vunpack.c.l.b16 %v45
  %v173 = vunpack.c.h.b16 %v45
  %v174 = vunpack.c.l.b16 %v46
  %v175 = vunpack.c.h.b16 %v46
  %v176 = vunpack.c.l.b16 %v47
  %v177 = vunpack.c.h.b16 %v47
  %v178 = vunpack.c.l.b16 %v48
  %v179 = vunpack.c.h.b16 %v48
  %v180 = vunpack.c.l.b16 %v49
  %v181 = vunpack.c.h.b16 %v49
  %v182 = vunpack.c.l.b16 %v50
  %v183 = vunpack.c.h.b16 %v50
  %v184 = vunpack.c.l.b16 %v51
  %v185 = vunpack.c.h.b16 %v51
  %v186 = vunpack.c.l.b16 %v52
  %v187 = vunpack.c.h.b16 %v52
  %v188 = vunpack.c.l.b16 %v53
  %v189 = vunpack.c.h.b16 %v53
  %v190 = vunpack.c.l.b16 %v54
  %v191 = vunpack.c.h.b16 %v54
  %v192 = vunpack.c.l.b16 %v55
  %v193 = vunpack.c.h.b16 %v55
  %v194 = vunpack.c.l.b16 %v56
  %v195 = vunpack.c.h.b16 %v56
  %v196 = vunpack.c.l.b16 %v57
  %v197 = vunpack.c.h.b16 %v57
  %v198 = vunpack.c.l.b16 %v58
  %v199 = vunpack.c.h.b16 %v58
  %v200 = vunpack.c.l.b16 %v59
  %v201 = vunpack.c.h.b16 %v59
  %v202 = vunpack.c.l.b16 %v60
  %v203 = vunpack.c.h.b16 %v60
  %v204 = vpack.c.b16 %v142, %v140
  %v205 = vpack.c.b16 %v143, %v141
  %v206 = vpack.c.b16 %v146, %v144
  %v207 = vpack.c.b16 %v147, %v145
  %v208 = vpack.c.b16 %v150, %v148
  %v209 = vpack.c.b16 %v151, %v149
  %v210 = vpack.c.b16 %v154, %v152
  %v211 = vpack.c.b16 %v155, %v153
  %v212 = vpack.c.b16 %v158, %v156
  %v213 = vpack.c.b16 %v159, %v157
  %v214 = vpack.c.b16 %v162, %v160
  %v215 = vpack.c.b16 %v163, %v161
  %v216 = vpack.c.b16 %v166, %v164
  %v217 = vpack.c.b16 %v167, %v165
  %v218 = vpack.c.b16 %v170, %v168
  %v219 = vpack.c.b16 %v171, %v169
  %v220 = vpack.c.b16 %v174, %v172
  %v221 = vpack.c.b16 %v175, %v173
  %v222 = vpack.c.b16 %v178, %v176
  %v223 = vpack.c.b16 %v179, %v177
  %v224 = vpack.c.b16 %v182, %v180
  %v225 = vpack.c.b16 %v183, %v181
  %v226 = vpack.c.b16 %v186, %v184
  %v227 = vpack.c.b16 %v187, %v185
  %v228 = vpack.c.b16 %v190, %v188
  %v229 = vpack.c.b16 %v191, %v189
  %v230 = vpack.c.b16 %v194, %v192
  %v231 = vpack.c.b16 %v195, %v193
  %v232 = vpack.c.b16 %v198, %v196
  %v233 = vpack.c.b16 %v199, %v197
  %v234 = vpack.c.b16 %v202, %v200
  %v235 = vpack.c.b16 %v203, %v201
  %268 = vmatprep.subr.bf16.mxu0 %v205
  %269 = vmatpush1.bf16.msra.mxu0 %v204
  %270 = vmatprep.subr.bf16.mxu0 %v207
  %271 = vmatpush1.bf16.msra.mxu0 %v206
  %272 = vmatprep.subr.bf16.mxu0 %v209
  %273 = vmatpush1.bf16.msra.mxu0 %v208
  %274 = vmatprep.subr.bf16.mxu0 %v211
  %275 = vmatpush1.bf16.msra.mxu0 %v210
  %276 = vmatprep.subr.bf16.mxu0 %v213
  %277 = vmatpush1.bf16.msra.mxu0 %v212
  %278 = vmatprep.subr.bf16.mxu0 %v215
  %279 = vmatpush1.bf16.msra.mxu0 %v214
  %280 = vmatprep.subr.bf16.mxu0 %v217
  %281 = vmatpush1.bf16.msra.mxu0 %v216
  %282 = vmatprep.subr.bf16.mxu0 %v219
  %283 = vmatpush1.bf16.msra.mxu0 %v218
  %284 = vmatprep.subr.bf16.mxu0 %v221
  %285 = vmatpush1.bf16.msra.mxu0 %v220
  %286 = vmatprep.subr.bf16.mxu0 %v223
  %287 = vmatpush1.bf16.msra.mxu0 %v222
  %288 = vmatprep.subr.bf16.mxu0 %v225
  %289 = vmatpush1.bf16.msra.mxu0 %v224
  %290 = vmatprep.subr.bf16.mxu0 %v227
  %291 = vmatpush1.bf16.msra.mxu0 %v226
  %292 = vmatprep.subr.bf16.mxu0 %v229
  %293 = vmatpush1.bf16.msra.mxu0 %v228
  %294 = vmatprep.subr.bf16.mxu0 %v231
  %295 = vmatpush1.bf16.msra.mxu0 %v230
  %296 = vmatprep.subr.bf16.mxu0 %v233
  %297 = vmatpush1.bf16.msra.mxu0 %v232
  %298 = vmatprep.subr.bf16.mxu0 %v235
  %299 = vmatpush1.bf16.msra.mxu0 %v234
  %300 = vmatprep.mubr.bf16.mxu0 %v89
  %301 = vmatmul.mubr.bf16.gmra.mrb[0].mxu0 %v88
  %v302 = vpop.f32.mrb[0].mxu0
  %v303 = vadd.f32 0.0, %v302
  %v304 = vpop.f32.mrb[0].mxu0
  %v305 = vadd.f32 0.0, %v304
  %v306 = vpop.f32.mrb[0].mxu0
  %v307 = vadd.f32 0.0, %v306
  %v308 = vpop.f32.mrb[0].mxu0
  %v309 = vadd.f32 0.0, %v308
  %310 = vmatprep.mubr.bf16.mxu0 %v91
  %311 = vmatmul.mubr.bf16.gmra.mrb[0].mxu0 %v90
  %v312 = vpop.f32.mrb[0].mxu0
  %v313 = vadd.f32 0.0, %v312
  %v314 = vpop.f32.mrb[0].mxu0
  %v315 = vadd.f32 0.0, %v314
  %v316 = vpop.f32.mrb[0].mxu0
  %v317 = vadd.f32 0.0, %v316
  %v318 = vpop.f32.mrb[0].mxu0
  %v319 = vadd.f32 0.0, %v318
  %320 = vmatprep.mubr.bf16.mxu0 %v93
  %321 = vmatmul.mubr.bf16.gmra.mrb[0].mxu0 %v92
  %v322 = vpop.f32.mrb[0].mxu0
  %v323 = vadd.f32 0.0, %v322
  %v324 = vpop.f32.mrb[0].mxu0
  %v325 = vadd.f32 0.0, %v324
  %v326 = vpop.f32.mrb[0].mxu0
  %v327 = vadd.f32 0.0, %v326
  %v328 = vpop.f32.mrb[0].mxu0
  %v329 = vadd.f32 0.0, %v328
  %330 = vmatprep.mubr.bf16.mxu0 %v95
  %331 = vmatmul.mubr.bf16.gmra.mrb[0].mxu0 %v94
  %v332 = vpop.f32.mrb[0].mxu0
  %v333 = vadd.f32 0.0, %v332
  %v334 = vpop.f32.mrb[0].mxu0
  %v335 = vadd.f32 0.0, %v334
  %v336 = vpop.f32.mrb[0].mxu0
  %v337 = vadd.f32 0.0, %v336
  %v338 = vpop.f32.mrb[0].mxu0
  %v339 = vadd.f32 0.0, %v338
  %340 = vmatprep.mubr.bf16.mxu0 %v97
  %341 = vmatmul.mubr.bf16.gmra.mrb[0].mxu0 %v96
  %v342 = vpop.f32.mrb[0].mxu0
  %v343 = vadd.f32 0.0, %v342
  %v344 = vpop.f32.mrb[0].mxu0
  %v345 = vadd.f32 0.0, %v344
  %v346 = vpop.f32.mrb[0].mxu0
  %v347 = vpop.f32.mrb[0].mxu0
  %348 = vdwg.mxu0
  %v349 = vlaneseq
  %v350 = vand.u32 %v349, 127
  %v351 = vadd.s32 %v350, 128
  %v352 = vand.u32 %v350, 127
  %v353 = vand.u32 %v351, 127
  %v354 = vshra.s32 %v352, 3
  %v355 = vshra.s32 %v353, 3
  %v356 = vand.u32 %v352, 7
  %v357 = vand.u32 %v353, 7
  %vm358 = vcmp.lt.s32.totalorder %v354, 8
  %vm359 = vcmp.lt.s32.totalorder %v355, 8
  %360 = vrot.lane.b32.xlu0 %v303, 9
  %v361 = vpop.permute.xlu0 %360
  %362 = vrot.lane.b32.xlu0 %v305, 9
  %v363 = vpop.permute.xlu0 %362
  %vm364 = vcmp.lt.s32.totalorder %v350, 9
  %v365 = vsel %vm364, %v361, %v363
  %v366 = vsel %vm364, %v363, %v361
  %v367 = vadd.s32 %v354, 4294967295
  %v368 = vadd.s32 %v355, 4294967295
  %vm369 = vcmp.ge.s32.totalorder %v367, 0
  %vm370 = vcmp.ge.s32.totalorder %v368, 0
  %vm371 = vcmp.lt.s32.totalorder %v367, 8
  %vm372 = vcmp.lt.s32.totalorder %v368, 8
  %vm373 = vmand %vm369, %vm371
  %vm374 = vmand %vm370, %vm372
  %v375 = vadd.s32 %v356, 4294967295
  %v376 = vadd.s32 %v357, 4294967295
  %vm377 = vcmp.ge.s32.totalorder %v375, 0
  %vm378 = vcmp.ge.s32.totalorder %v376, 0
  %vm379 = vmand %vm373, %vm377
  %vm380 = vmand %vm374, %vm378
  %vm381 = vcmp.lt.s32.totalorder %v375, 8
  %vm382 = vcmp.lt.s32.totalorder %v376, 8
  %vm383 = vmand %vm379, %vm381
  %vm384 = vmand %vm380, %vm382
  %vm385 = vmand %vm383, %vm358
  %vm386 = vmand %vm384, %vm359
  %v387 = vsel %vm385, 1, 0
  %v388 = vsel %vm386, 1, 0
  %vm389 = vcmp.eq.s32.totalorder %v387, 1
  %vm390 = vcmp.eq.s32.totalorder %v388, 1
  %v391 = vsel %vm389, %v366, 0.0
  %v392 = vsel %vm390, %v365, 0.0
  %393 = vrot.lane.b32.xlu0 %v307, 8
  %v394 = vpop.permute.xlu0 %393
  %395 = vrot.lane.b32.xlu0 %v309, 8
  %v396 = vpop.permute.xlu0 %395
  %vm397 = vcmp.lt.s32.totalorder %v350, 8
  %v398 = vsel %vm397, %v394, %v396
  %v399 = vsel %vm397, %v396, %v394
  %vm400 = vcmp.ge.s32.totalorder %v356, 0
  %vm401 = vcmp.ge.s32.totalorder %v357, 0
  %vm402 = vmand %vm373, %vm400
  %vm403 = vmand %vm374, %vm401
  %vm404 = vcmp.lt.s32.totalorder %v356, 8
  %vm405 = vcmp.lt.s32.totalorder %v357, 8
  %vm406 = vmand %vm402, %vm404
  %vm407 = vmand %vm403, %vm405
  %vm408 = vmand %vm406, %vm358
  %vm409 = vmand %vm407, %vm359
  %v410 = vsel %vm408, 1, 0
  %v411 = vsel %vm409, 1, 0
  %vm412 = vcmp.eq.s32.totalorder %v410, 1
  %vm413 = vcmp.eq.s32.totalorder %v411, 1
  %v414 = vsel %vm412, %v399, 0.0
  %v415 = vsel %vm413, %v398, 0.0
  %v416 = vadd.f32 %v391, %v414
  %v417 = vadd.f32 %v392, %v415
  %418 = vrot.lane.b32.xlu0 %v313, 7
  %v419 = vpop.permute.xlu0 %418
  %420 = vrot.lane.b32.xlu0 %v315, 7
  %v421 = vpop.permute.xlu0 %420
  %vm422 = vcmp.lt.s32.totalorder %v350, 7
  %v423 = vsel %vm422, %v419, %v421
  %v424 = vsel %vm422, %v421, %v419
  %v425 = vadd.s32 %v356, 1
  %v426 = vadd.s32 %v357, 1
  %vm427 = vcmp.ge.s32.totalorder %v425, 0
  %vm428 = vcmp.ge.s32.totalorder %v426, 0
  %vm429 = vmand %vm373, %vm427
  %vm430 = vmand %vm374, %vm428
  %vm431 = vcmp.lt.s32.totalorder %v425, 8
  %vm432 = vcmp.lt.s32.totalorder %v426, 8
  %vm433 = vmand %vm429, %vm431
  %vm434 = vmand %vm430, %vm432
  %vm435 = vmand %vm433, %vm358
  %vm436 = vmand %vm434, %vm359
  %v437 = vsel %vm435, 1, 0
  %v438 = vsel %vm436, 1, 0
  %vm439 = vcmp.eq.s32.totalorder %v437, 1
  %vm440 = vcmp.eq.s32.totalorder %v438, 1
  %v441 = vsel %vm439, %v424, 0.0
  %v442 = vsel %vm440, %v423, 0.0
  %v443 = vadd.f32 %v416, %v441
  %v444 = vadd.f32 %v417, %v442
  %445 = vrot.lane.b32.xlu0 %v317, 1
  %v446 = vpop.permute.xlu0 %445
  %447 = vrot.lane.b32.xlu0 %v319, 1
  %v448 = vpop.permute.xlu0 %447
  %vm449 = vcmp.lt.s32.totalorder %v350, 1
  %v450 = vsel %vm449, %v446, %v448
  %v451 = vsel %vm449, %v448, %v446
  %vm452 = vcmp.ge.s32.totalorder %v354, 0
  %vm453 = vcmp.ge.s32.totalorder %v355, 0
  %vm454 = vmand %vm452, %vm358
  %vm455 = vmand %vm453, %vm359
  %vm456 = vmand %vm454, %vm377
  %vm457 = vmand %vm455, %vm378
  %vm458 = vmand %vm456, %vm381
  %vm459 = vmand %vm457, %vm382
  %vm460 = vmand %vm458, %vm358
  %vm461 = vmand %vm459, %vm359
  %v462 = vsel %vm460, 1, 0
  %v463 = vsel %vm461, 1, 0
  %vm464 = vcmp.eq.s32.totalorder %v462, 1
  %vm465 = vcmp.eq.s32.totalorder %v463, 1
  %v466 = vsel %vm464, %v451, 0.0
  %v467 = vsel %vm465, %v450, 0.0
  %v468 = vadd.f32 %v443, %v466
  %v469 = vadd.f32 %v444, %v467
  %vm470 = vmand %vm454, %vm400
  %vm471 = vmand %vm455, %vm401
  %vm472 = vmand %vm470, %vm404
  %vm473 = vmand %vm471, %vm405
  %vm474 = vmand %vm472, %vm358
  %vm475 = vmand %vm473, %vm359
  %v476 = vsel %vm474, 1, 0
  %v477 = vsel %vm475, 1, 0
  %vm478 = vcmp.eq.s32.totalorder %v476, 1
  %vm479 = vcmp.eq.s32.totalorder %v477, 1
  %v480 = vsel %vm478, %v323, 0.0
  %v481 = vsel %vm479, %v325, 0.0
  %v482 = vadd.f32 %v468, %v480
  %v483 = vadd.f32 %v469, %v481
  %484 = vrot.lane.b32.xlu0 %v327, 127
  %v485 = vpop.permute.xlu0 %484
  %486 = vrot.lane.b32.xlu0 %v329, 127
  %v487 = vpop.permute.xlu0 %486
  %vm488 = vcmp.lt.s32.totalorder %v350, 127
  %v489 = vsel %vm488, %v485, %v487
  %v490 = vsel %vm488, %v487, %v485
  %vm491 = vmand %vm454, %vm427
  %vm492 = vmand %vm455, %vm428
  %vm493 = vmand %vm491, %vm431
  %vm494 = vmand %vm492, %vm432
  %vm495 = vmand %vm493, %vm358
  %vm496 = vmand %vm494, %vm359
  %v497 = vsel %vm495, 1, 0
  %v498 = vsel %vm496, 1, 0
  %vm499 = vcmp.eq.s32.totalorder %v497, 1
  %vm500 = vcmp.eq.s32.totalorder %v498, 1
  %v501 = vsel %vm499, %v489, 0.0
  %v502 = vsel %vm500, %v490, 0.0
  %v503 = vadd.f32 %v482, %v501
  %v504 = vadd.f32 %v483, %v502
  %505 = vrot.lane.b32.xlu0 %v333, 121
  %v506 = vpop.permute.xlu0 %505
  %507 = vrot.lane.b32.xlu0 %v335, 121
  %v508 = vpop.permute.xlu0 %507
  %vm509 = vcmp.lt.s32.totalorder %v350, 121
  %v510 = vsel %vm509, %v506, %v508
  %v511 = vsel %vm509, %v508, %v506
  %v512 = vadd.s32 %v354, 1
  %v513 = vadd.s32 %v355, 1
  %vm514 = vcmp.ge.s32.totalorder %v512, 0
  %vm515 = vcmp.ge.s32.totalorder %v513, 0
  %vm516 = vcmp.lt.s32.totalorder %v512, 8
  %vm517 = vcmp.lt.s32.totalorder %v513, 8
  %vm518 = vmand %vm514, %vm516
  %vm519 = vmand %vm515, %vm517
  %vm520 = vmand %vm518, %vm377
  %vm521 = vmand %vm519, %vm378
  %vm522 = vmand %vm520, %vm381
  %vm523 = vmand %vm521, %vm382
  %vm524 = vmand %vm522, %vm358
  %vm525 = vmand %vm523, %vm359
  %v526 = vsel %vm524, 1, 0
  %v527 = vsel %vm525, 1, 0
  %vm528 = vcmp.eq.s32.totalorder %v526, 1
  %vm529 = vcmp.eq.s32.totalorder %v527, 1
  %v530 = vsel %vm528, %v510, 0.0
  %v531 = vsel %vm529, %v511, 0.0
  %v532 = vadd.f32 %v503, %v530
  %v533 = vadd.f32 %v504, %v531
  %534 = vrot.lane.b32.xlu0 %v337, 120
  %v535 = vpop.permute.xlu0 %534
  %536 = vrot.lane.b32.xlu0 %v339, 120
  %v537 = vpop.permute.xlu0 %536
  %vm538 = vcmp.lt.s32.totalorder %v350, 120
  %v539 = vsel %vm538, %v535, %v537
  %v540 = vsel %vm538, %v537, %v535
  %vm541 = vmand %vm518, %vm400
  %vm542 = vmand %vm519, %vm401
  %vm543 = vmand %vm541, %vm404
  %vm544 = vmand %vm542, %vm405
  %vm545 = vmand %vm543, %vm358
  %vm546 = vmand %vm544, %vm359
  %v547 = vsel %vm545, 1, 0
  %v548 = vsel %vm546, 1, 0
  %vm549 = vcmp.eq.s32.totalorder %v547, 1
  %vm550 = vcmp.eq.s32.totalorder %v548, 1
  %v551 = vsel %vm549, %v539, 0.0
  %v552 = vsel %vm550, %v540, 0.0
  %v553 = vadd.f32 %v532, %v551
  %v554 = vadd.f32 %v533, %v552
  %555 = vrot.lane.b32.xlu0 %v343, 119
  %v556 = vpop.permute.xlu0 %555
  %557 = vrot.lane.b32.xlu0 %v345, 119
  %v558 = vpop.permute.xlu0 %557
  %vm559 = vcmp.lt.s32.totalorder %v350, 119
  %v560 = vsel %vm559, %v556, %v558
  %v561 = vsel %vm559, %v558, %v556
  %vm562 = vmand %vm518, %vm427
  %vm563 = vmand %vm519, %vm428
  %vm564 = vmand %vm562, %vm431
  %vm565 = vmand %vm563, %vm432
  %vm566 = vmand %vm564, %vm358
  %vm567 = vmand %vm565, %vm359
  %v568 = vsel %vm566, 1, 0
  %v569 = vsel %vm567, 1, 0
  %vm570 = vcmp.eq.s32.totalorder %v568, 1
  %vm571 = vcmp.eq.s32.totalorder %v569, 1
  %v572 = vsel %vm570, %v560, 0.0
  %v573 = vsel %vm571, %v561, 0.0
  %v574 = vadd.f32 %v553, %v572
  %v575 = vadd.f32 %v554, %v573
  %v576 = vld [vmem:[%s3] sm:$0xf]
  %578 = vset.pattern.permute.xlu0 0
  %579 = vperm.xlu0 %578, %v576
  %v580 = vpop.permute.xlu0 %579
  %v582 = vadd.f32 %v574, %v580
  %v583 = vadd.f32 %v575, %v580
  %v584 = vmax.f32 %v582, 0.0
  %v585 = vmax.f32 %v583, 0.0
  %v586 = vsel %vm358, 1, 0
  %v587 = vsel %vm359, 1, 0
  %vm588 = vcmp.eq.s32.totalorder %v586, 1
  %vm589 = vcmp.eq.s32.totalorder %v587, 1
  %v590 = vsel %vm588, %v584, 0.0
  %v591 = vsel %vm589, %v585, 0.0
  %vm592 = vcmask 1043456
  %v593 = vsel %vm592, %v590, 0.0
  %v594 = vsel %vm592, %v591, 0.0
  %v595 = vadd.f32 %v593, %v594
  %596 = vadd.xlane.f32.xlu0 %v595
  %v597 = vpop.xlane.xlu0 %596
  %v598 = vmul.f32 %v597, 0.0078125
  %v599 = vsub.f32 %v590, %v598
  %v600 = vsub.f32 %v591, %v598
  %v601 = vsel %vm588, %v599, 0.0
  %v602 = vsel %vm589, %v600, 0.0
  %v603 = vmul.f32 %v601, %v601
  %v604 = vmul.f32 %v602, %v602
  %v605 = vsel %vm592, %v603, 0.0
  %v606 = vsel %vm592, %v604, 0.0
  %v607 = vadd.f32 %v605, %v606
  %608 = vadd.xlane.f32.xlu0 %v607
  %v609 = vpop.xlane.xlu0 %608
  %v610 = vmul.f32 %v609, 0.0078125
  %v611 = vadd.f32 %v610, 1e-05
  %v612 = vrsqrt.pop %v611
  %v613 = vmul.f32 %v601, %v612
  %v614 = vmul.f32 %v602, %v612
  %615 = vset.pattern.permute.xlu0 1
  %616 = vperm.xlu0 %615, %v576
  %v617 = vpop.permute.xlu0 %616
  %v619 = vmul.f32 %v613, %v617
  %v620 = vmul.f32 %v614, %v617
  %621 = vset.pattern.permute.xlu0 2
  %622 = vperm.xlu0 %621, %v576
  %v623 = vpop.permute.xlu0 %622
  %v625 = vadd.f32 %v619, %v623
  %v626 = vadd.f32 %v620, %v623
  %v627 = vld [vmem:[%s2] sm:$0xff]
  %v628 = vld [vmem:[%s2 + $0x8] sm:$0xff]
  %v629 = vld [vmem:[%s2 + $0x10] sm:$0xff]
  %v630 = vld [vmem:[%s2 + $0x18] sm:$0xff]
  %v631 = vld [vmem:[%s2 + $0x20] sm:$0xff]
  %v632 = vld [vmem:[%s2 + $0x28] sm:$0xff]
  %v633 = vld [vmem:[%s2 + $0x30] sm:$0xff]
  %v634 = vld [vmem:[%s2 + $0x38] sm:$0xff]
  %v635 = vld [vmem:[%s2 + $0x40] sm:$0xff]
  %v636 = vld [vmem:[%s2 + $0x48] sm:$0xff]
  %v637 = vld [vmem:[%s2 + $0x50] sm:$0xff]
  %v638 = vld [vmem:[%s2 + $0x58] sm:$0xff]
  %v639 = vld [vmem:[%s2 + $0x60] sm:$0xff]
  %v640 = vld [vmem:[%s2 + $0x68] sm:$0xff]
  %v641 = vld [vmem:[%s2 + $0x70] sm:$0xff]
  %v642 = vld [vmem:[%s2 + $0x78] sm:$0xff]
  %v643 = vld [vmem:[%s2 + $0x80] sm:$0xff]
  %v644 = vld [vmem:[%s2 + $0x88] sm:$0xff]
  %v645 = vld [vmem:[%s2 + $0x90] sm:$0xff]
  %v646 = vld [vmem:[%s2 + $0x98] sm:$0xff]
  %v647 = vld [vmem:[%s2 + $0xa0] sm:$0xff]
  %v648 = vld [vmem:[%s2 + $0xa8] sm:$0xff]
  %v649 = vld [vmem:[%s2 + $0xb0] sm:$0xff]
  %v650 = vld [vmem:[%s2 + $0xb8] sm:$0xff]
  %v651 = vld [vmem:[%s2 + $0xc0] sm:$0xff]
  %v652 = vld [vmem:[%s2 + $0xc8] sm:$0xff]
  %v653 = vld [vmem:[%s2 + $0xd0] sm:$0xff]
  %v654 = vld [vmem:[%s2 + $0xd8] sm:$0xff]
  %v655 = vld [vmem:[%s2 + $0xe0] sm:$0xff]
  %v656 = vld [vmem:[%s2 + $0xe8] sm:$0xff]
  %v657 = vld [vmem:[%s2 + $0xf0] sm:$0xff]
  %v658 = vld [vmem:[%s2 + $0xf8] sm:$0xff]
  %v659 = vld [vmem:[%s2 + $0x100] sm:$0xff]
  %v660 = vld [vmem:[%s2 + $0x108] sm:$0xff]
  %v661 = vld [vmem:[%s2 + $0x110] sm:$0xff]
  %v662 = vld [vmem:[%s2 + $0x118] sm:$0xff]
  %v663 = vld [vmem:[%s2 + $0x120] sm:$0xff]
  %v664 = vld [vmem:[%s2 + $0x128] sm:$0xff]
  %v665 = vld [vmem:[%s2 + $0x130] sm:$0xff]
  %v666 = vld [vmem:[%s2 + $0x138] sm:$0xff]
  %v667 = vld [vmem:[%s2 + $0x140] sm:$0xff]
  %v668 = vld [vmem:[%s2 + $0x148] sm:$0xff]
  %v669 = vld [vmem:[%s2 + $0x150] sm:$0xff]
  %v670 = vld [vmem:[%s2 + $0x158] sm:$0xff]
  %v671 = vld [vmem:[%s2 + $0x160] sm:$0xff]
  %v672 = vld [vmem:[%s2 + $0x168] sm:$0xff]
  %v673 = vld [vmem:[%s2 + $0x170] sm:$0xff]
  %v674 = vld [vmem:[%s2 + $0x178] sm:$0xff]
  %v675 = vld [vmem:[%s2 + $0x180] sm:$0xff]
  %v676 = vld [vmem:[%s2 + $0x188] sm:$0xff]
  %v677 = vld [vmem:[%s2 + $0x190] sm:$0xff]
  %v678 = vld [vmem:[%s2 + $0x198] sm:$0xff]
  %v679 = vld [vmem:[%s2 + $0x1a0] sm:$0xff]
  %v680 = vld [vmem:[%s2 + $0x1a8] sm:$0xff]
  %v681 = vld [vmem:[%s2 + $0x1b0] sm:$0xff]
  %v682 = vld [vmem:[%s2 + $0x1b8] sm:$0xff]
  %v683 = vld [vmem:[%s2 + $0x1c0] sm:$0xff]
  %v684 = vld [vmem:[%s2 + $0x1c8] sm:$0xff]
  %v685 = vld [vmem:[%s2 + $0x1d0] sm:$0xff]
  %v686 = vld [vmem:[%s2 + $0x1d8] sm:$0xff]
  %v687 = vld [vmem:[%s2 + $0x1e0] sm:$0xff]
  %v688 = vld [vmem:[%s2 + $0x1e8] sm:$0xff]
  %v689 = vld [vmem:[%s2 + $0x1f0] sm:$0xff]
  %v690 = vld [vmem:[%s2 + $0x1f8] sm:$0xff]
  %691 = vmatprep.subr.mxu0 %v628
  %692 = vmatpush1.msra.mxu0 %v627
  %693 = vmatprep.subr.mxu0 %v632
  %694 = vmatpush1.msra.mxu0 %v631
  %695 = vmatprep.subr.mxu0 %v636
  %696 = vmatpush1.msra.mxu0 %v635
  %697 = vmatprep.subr.mxu0 %v640
  %698 = vmatpush1.msra.mxu0 %v639
  %699 = vmatprep.subr.mxu0 %v644
  %700 = vmatpush1.msra.mxu0 %v643
  %701 = vmatprep.subr.mxu0 %v648
  %702 = vmatpush1.msra.mxu0 %v647
  %703 = vmatprep.subr.mxu0 %v652
  %704 = vmatpush1.msra.mxu0 %v651
  %705 = vmatprep.subr.mxu0 %v656
  %706 = vmatpush1.msra.mxu0 %v655
  %707 = vmatprep.subr.mxu0 %v660
  %708 = vmatpush1.msra.mxu0 %v659
  %709 = vmatprep.subr.mxu0 %v664
  %710 = vmatpush1.msra.mxu0 %v663
  %711 = vmatprep.subr.mxu0 %v668
  %712 = vmatpush1.msra.mxu0 %v667
  %713 = vmatprep.subr.mxu0 %v672
  %714 = vmatpush1.msra.mxu0 %v671
  %715 = vmatprep.subr.mxu0 %v676
  %716 = vmatpush1.msra.mxu0 %v675
  %717 = vmatprep.subr.mxu0 %v680
  %718 = vmatpush1.msra.mxu0 %v679
  %719 = vmatprep.subr.mxu0 %v684
  %720 = vmatpush1.msra.mxu0 %v683
  %721 = vmatprep.subr.mxu0 %v688
  %722 = vmatpush1.msra.mxu0 %v687
  %723 = vmatprep.subr.mxu0 0.0
  %724 = vmatpush1.msra.mxu0 0.0
  %725 = vmatprep.subr.mxu0 0.0
  %726 = vmatpush1.msra.mxu0 0.0
  %727 = vmatprep.subr.mxu0 0.0
  %728 = vmatpush1.msra.mxu0 0.0
  %729 = vmatprep.subr.mxu0 0.0
  %730 = vmatpush1.msra.mxu0 0.0
  %731 = vmatprep.subr.mxu0 0.0
  %732 = vmatpush1.msra.mxu0 0.0
  %733 = vmatprep.subr.mxu0 0.0
  %734 = vmatpush1.msra.mxu0 0.0
  %735 = vmatprep.subr.mxu0 0.0
  %736 = vmatpush1.msra.mxu0 0.0
  %737 = vmatprep.subr.mxu0 0.0
  %738 = vmatpush1.msra.mxu0 0.0
  %739 = vmatprep.subr.mxu0 0.0
  %740 = vmatpush1.msra.mxu0 0.0
  %741 = vmatprep.subr.mxu0 0.0
  %742 = vmatpush1.msra.mxu0 0.0
  %743 = vmatprep.subr.mxu0 0.0
  %744 = vmatpush1.msra.mxu0 0.0
  %745 = vmatprep.subr.mxu0 0.0
  %746 = vmatpush1.msra.mxu0 0.0
  %747 = vmatprep.subr.mxu0 0.0
  %748 = vmatpush1.msra.mxu0 0.0
  %749 = vmatprep.subr.mxu0 0.0
  %750 = vmatpush1.msra.mxu0 0.0
  %751 = vmatprep.subr.mxu0 0.0
  %752 = vmatpush1.msra.mxu0 0.0
  %753 = vmatprep.subr.mxu0 0.0
  %754 = vmatpush1.msra.mxu0 0.0
  %755 = vmatprep.mubr.f32.mxu0 0.0
  %756 = vmatmul.mubr.f32.gmra.mrb[0].mxu0 %v625
  %v757 = vpop.f32.mrb[0].mxu0
  %v758 = vadd.f32 0.0, %v757
  %v759 = vpop.f32.mrb[0].mxu0
  %v760 = vadd.f32 0.0, %v759
  %761 = vdwg.mxu0
  %762 = vmatprep.subr.mxu0 %v630
  %763 = vmatpush1.msra.mxu0 %v629
  %764 = vmatprep.subr.mxu0 %v634
  %765 = vmatpush1.msra.mxu0 %v633
  %766 = vmatprep.subr.mxu0 %v638
  %767 = vmatpush1.msra.mxu0 %v637
  %768 = vmatprep.subr.mxu0 %v642
  %769 = vmatpush1.msra.mxu0 %v641
  %770 = vmatprep.subr.mxu0 %v646
  %771 = vmatpush1.msra.mxu0 %v645
  %772 = vmatprep.subr.mxu0 %v650
  %773 = vmatpush1.msra.mxu0 %v649
  %774 = vmatprep.subr.mxu0 %v654
  %775 = vmatpush1.msra.mxu0 %v653
  %776 = vmatprep.subr.mxu0 %v658
  %777 = vmatpush1.msra.mxu0 %v657
  %778 = vmatprep.subr.mxu0 %v662
  %779 = vmatpush1.msra.mxu0 %v661
  %780 = vmatprep.subr.mxu0 %v666
  %781 = vmatpush1.msra.mxu0 %v665
  %782 = vmatprep.subr.mxu0 %v670
  %783 = vmatpush1.msra.mxu0 %v669
  %784 = vmatprep.subr.mxu0 %v674
  %785 = vmatpush1.msra.mxu0 %v673
  %786 = vmatprep.subr.mxu0 %v678
  %787 = vmatpush1.msra.mxu0 %v677
  %788 = vmatprep.subr.mxu0 %v682
  %789 = vmatpush1.msra.mxu0 %v681
  %790 = vmatprep.subr.mxu0 %v686
  %791 = vmatpush1.msra.mxu0 %v685
  %792 = vmatprep.subr.mxu0 %v690
  %793 = vmatpush1.msra.mxu0 %v689
  %794 = vmatprep.subr.mxu0 0.0
  %795 = vmatpush1.msra.mxu0 0.0
  %796 = vmatprep.subr.mxu0 0.0
  %797 = vmatpush1.msra.mxu0 0.0
  %798 = vmatprep.subr.mxu0 0.0
  %799 = vmatpush1.msra.mxu0 0.0
  %800 = vmatprep.subr.mxu0 0.0
  %801 = vmatpush1.msra.mxu0 0.0
  %802 = vmatprep.subr.mxu0 0.0
  %803 = vmatpush1.msra.mxu0 0.0
  %804 = vmatprep.subr.mxu0 0.0
  %805 = vmatpush1.msra.mxu0 0.0
  %806 = vmatprep.subr.mxu0 0.0
  %807 = vmatpush1.msra.mxu0 0.0
  %808 = vmatprep.subr.mxu0 0.0
  %809 = vmatpush1.msra.mxu0 0.0
  %810 = vmatprep.subr.mxu0 0.0
  %811 = vmatpush1.msra.mxu0 0.0
  %812 = vmatprep.subr.mxu0 0.0
  %813 = vmatpush1.msra.mxu0 0.0
  %814 = vmatprep.subr.mxu0 0.0
  %815 = vmatpush1.msra.mxu0 0.0
  %816 = vmatprep.subr.mxu0 0.0
  %817 = vmatpush1.msra.mxu0 0.0
  %818 = vmatprep.subr.mxu0 0.0
  %819 = vmatpush1.msra.mxu0 0.0
  %820 = vmatprep.subr.mxu0 0.0
  %821 = vmatpush1.msra.mxu0 0.0
  %822 = vmatprep.subr.mxu0 0.0
  %823 = vmatpush1.msra.mxu0 0.0
  %824 = vmatprep.subr.mxu0 0.0
  %825 = vmatpush1.msra.mxu0 0.0
  %826 = vmatprep.mubr.f32.mxu0 0.0
  %827 = vmatmul.mubr.f32.gmra.mrb[0].mxu0 %v625
  %v828 = vpop.f32.mrb[0].mxu0
  %v829 = vadd.f32 0.0, %v828
  %v830 = vpop.f32.mrb[0].mxu0
  %v831 = vadd.f32 0.0, %v830
  %832 = vdwg.mxu0
  %v834 = vrot.slane %v760, 1
  %v836 = vadd.f32 %v758, %v834
  %v838 = vrot.slane %v829, 2
  %v840 = vadd.f32 %v836, %v838
  %v842 = vrot.slane %v831, 3
  %v844 = vadd.f32 %v840, %v842
  %845 = vmatprep.subr.mxu0 %v628
  %846 = vmatpush1.msra.mxu0 %v627
  %847 = vmatprep.subr.mxu0 %v632
  %848 = vmatpush1.msra.mxu0 %v631
  %849 = vmatprep.subr.mxu0 %v636
  %850 = vmatpush1.msra.mxu0 %v635
  %851 = vmatprep.subr.mxu0 %v640
  %852 = vmatpush1.msra.mxu0 %v639
  %853 = vmatprep.subr.mxu0 %v644
  %854 = vmatpush1.msra.mxu0 %v643
  %855 = vmatprep.subr.mxu0 %v648
  %856 = vmatpush1.msra.mxu0 %v647
  %857 = vmatprep.subr.mxu0 %v652
  %858 = vmatpush1.msra.mxu0 %v651
  %859 = vmatprep.subr.mxu0 %v656
  %860 = vmatpush1.msra.mxu0 %v655
  %861 = vmatprep.subr.mxu0 %v660
  %862 = vmatpush1.msra.mxu0 %v659
  %863 = vmatprep.subr.mxu0 %v664
  %864 = vmatpush1.msra.mxu0 %v663
  %865 = vmatprep.subr.mxu0 %v668
  %866 = vmatpush1.msra.mxu0 %v667
  %867 = vmatprep.subr.mxu0 %v672
  %868 = vmatpush1.msra.mxu0 %v671
  %869 = vmatprep.subr.mxu0 %v676
  %870 = vmatpush1.msra.mxu0 %v675
  %871 = vmatprep.subr.mxu0 %v680
  %872 = vmatpush1.msra.mxu0 %v679
  %873 = vmatprep.subr.mxu0 %v684
  %874 = vmatpush1.msra.mxu0 %v683
  %875 = vmatprep.subr.mxu0 %v688
  %876 = vmatpush1.msra.mxu0 %v687
  %877 = vmatprep.subr.mxu0 0.0
  %878 = vmatpush1.msra.mxu0 0.0
  %879 = vmatprep.subr.mxu0 0.0
  %880 = vmatpush1.msra.mxu0 0.0
  %881 = vmatprep.subr.mxu0 0.0
  %882 = vmatpush1.msra.mxu0 0.0
  %883 = vmatprep.subr.mxu0 0.0
  %884 = vmatpush1.msra.mxu0 0.0
  %885 = vmatprep.subr.mxu0 0.0
  %886 = vmatpush1.msra.mxu0 0.0
  %887 = vmatprep.subr.mxu0 0.0
  %888 = vmatpush1.msra.mxu0 0.0
  %889 = vmatprep.subr.mxu0 0.0
  %890 = vmatpush1.msra.mxu0 0.0
  %891 = vmatprep.subr.mxu0 0.0
  %892 = vmatpush1.msra.mxu0 0.0
  %893 = vmatprep.subr.mxu0 0.0
  %894 = vmatpush1.msra.mxu0 0.0
  %895 = vmatprep.subr.mxu0 0.0
  %896 = vmatpush1.msra.mxu0 0.0
  %897 = vmatprep.subr.mxu0 0.0
  %898 = vmatpush1.msra.mxu0 0.0
  %899 = vmatprep.subr.mxu0 0.0
  %900 = vmatpush1.msra.mxu0 0.0
  %901 = vmatprep.subr.mxu0 0.0
  %902 = vmatpush1.msra.mxu0 0.0
  %903 = vmatprep.subr.mxu0 0.0
  %904 = vmatpush1.msra.mxu0 0.0
  %905 = vmatprep.subr.mxu0 0.0
  %906 = vmatpush1.msra.mxu0 0.0
  %907 = vmatprep.subr.mxu0 0.0
  %908 = vmatpush1.msra.mxu0 0.0
  %909 = vmatprep.mubr.f32.mxu0 0.0
  %910 = vmatmul.mubr.f32.gmra.mrb[0].mxu0 %v626
  %v911 = vpop.f32.mrb[0].mxu0
  %v912 = vadd.f32 0.0, %v911
  %v913 = vpop.f32.mrb[0].mxu0
  %v914 = vadd.f32 0.0, %v913
  %915 = vdwg.mxu0
  %916 = vmatprep.subr.mxu0 %v630
  %917 = vmatpush1.msra.mxu0 %v629
  %918 = vmatprep.subr.mxu0 %v634
  %919 = vmatpush1.msra.mxu0 %v633
  %920 = vmatprep.subr.mxu0 %v638
  %921 = vmatpush1.msra.mxu0 %v637
  %922 = vmatprep.subr.mxu0 %v642
  %923 = vmatpush1.msra.mxu0 %v641
  %924 = vmatprep.subr.mxu0 %v646
  %925 = vmatpush1.msra.mxu0 %v645
  %926 = vmatprep.subr.mxu0 %v650
  %927 = vmatpush1.msra.mxu0 %v649
  %928 = vmatprep.subr.mxu0 %v654
  %929 = vmatpush1.msra.mxu0 %v653
  %930 = vmatprep.subr.mxu0 %v658
  %931 = vmatpush1.msra.mxu0 %v657
  %932 = vmatprep.subr.mxu0 %v662
  %933 = vmatpush1.msra.mxu0 %v661
  %934 = vmatprep.subr.mxu0 %v666
  %935 = vmatpush1.msra.mxu0 %v665
  %936 = vmatprep.subr.mxu0 %v670
  %937 = vmatpush1.msra.mxu0 %v669
  %938 = vmatprep.subr.mxu0 %v674
  %939 = vmatpush1.msra.mxu0 %v673
  %940 = vmatprep.subr.mxu0 %v678
  %941 = vmatpush1.msra.mxu0 %v677
  %942 = vmatprep.subr.mxu0 %v682
  %943 = vmatpush1.msra.mxu0 %v681
  %944 = vmatprep.subr.mxu0 %v686
  %945 = vmatpush1.msra.mxu0 %v685
  %946 = vmatprep.subr.mxu0 %v690
  %947 = vmatpush1.msra.mxu0 %v689
  %948 = vmatprep.subr.mxu0 0.0
  %949 = vmatpush1.msra.mxu0 0.0
  %950 = vmatprep.subr.mxu0 0.0
  %951 = vmatpush1.msra.mxu0 0.0
  %952 = vmatprep.subr.mxu0 0.0
  %953 = vmatpush1.msra.mxu0 0.0
  %954 = vmatprep.subr.mxu0 0.0
  %955 = vmatpush1.msra.mxu0 0.0
  %956 = vmatprep.subr.mxu0 0.0
  %957 = vmatpush1.msra.mxu0 0.0
  %958 = vmatprep.subr.mxu0 0.0
  %959 = vmatpush1.msra.mxu0 0.0
  %960 = vmatprep.subr.mxu0 0.0
  %961 = vmatpush1.msra.mxu0 0.0
  %962 = vmatprep.subr.mxu0 0.0
  %963 = vmatpush1.msra.mxu0 0.0
  %964 = vmatprep.subr.mxu0 0.0
  %965 = vmatpush1.msra.mxu0 0.0
  %966 = vmatprep.subr.mxu0 0.0
  %967 = vmatpush1.msra.mxu0 0.0
  %968 = vmatprep.subr.mxu0 0.0
  %969 = vmatpush1.msra.mxu0 0.0
  %970 = vmatprep.subr.mxu0 0.0
  %971 = vmatpush1.msra.mxu0 0.0
  %972 = vmatprep.subr.mxu0 0.0
  %973 = vmatpush1.msra.mxu0 0.0
  %974 = vmatprep.subr.mxu0 0.0
  %975 = vmatpush1.msra.mxu0 0.0
  %976 = vmatprep.subr.mxu0 0.0
  %977 = vmatpush1.msra.mxu0 0.0
  %978 = vmatprep.subr.mxu0 0.0
  %979 = vmatpush1.msra.mxu0 0.0
  %980 = vmatprep.mubr.f32.mxu0 0.0
  %981 = vmatmul.mubr.f32.gmra.mrb[0].mxu0 %v626
  %v982 = vpop.f32.mrb[0].mxu0
  %v983 = vadd.f32 0.0, %v982
  %v984 = vpop.f32.mrb[0].mxu0
  %v985 = vadd.f32 0.0, %v984
  %986 = vdwg.mxu0
  %v988 = vrot.slane %v914, 1
  %v990 = vadd.f32 %v912, %v988
  %v992 = vrot.slane %v983, 2
  %v994 = vadd.f32 %v990, %v992
  %v996 = vrot.slane %v985, 3
  %v998 = vadd.f32 %v994, %v996
  %v1000 = vrot.slane %v998, 7
  %vm1002 = vcmask 1040384
  %v1003 = vsel %vm1002, %v844, %v1000
  %v1004 = vld [vmem:[%s4] sm:$0x1]
  %v1005 = vlaneseq
  %v1006 = vshrl.u32 %v1005, 7
  %v1007 = vsub.s32 0, %v1006
  %v1008 = vrot.slane %v1004, %v1007
  %v1009 = vadd.f32 %v1003, %v1008
  %vm1010 = vcmask 517120
  %v1011 = vsel %vm1010, %v1009, -inf
  %1012 = vmax.xlane.f32.xlu0 %v1011
  %v1013 = vpop.xlane.xlu0 %1012
  %v1014 = vsub.f32 %v1009, %v1013
  %v1015 = vmul.f32 %v1014, 1.442695
  %v1016 = vpow.pop %v1015
  %v1017 = vsel %vm1010, %v1016, 0.0
  %1018 = vadd.xlane.f32.xlu0 %v1017
  %v1019 = vpop.xlane.xlu0 %1018
  %v1020 = vrcp.pop %v1019
  %v1021 = vmul.f32 %v1016, %v1020
  %v1022 = vld [vmem:[%s4 + $0x1] sm:$0x1]
  %v1023 = vlaneseq
  %v1024 = vshrl.u32 %v1023, 7
  %v1025 = vsub.s32 0, %v1024
  %v1026 = vrot.slane %v1022, %v1025
  %1028 = vrot.lane.b32.xlu0 %v1026, 64
  %v1029 = vpop.permute.xlu0 %1028
  %v1031 = vadd.f32 %v1003, %v1029
  %v1032 = vmax.f32 %v1031, 0.0
  %v1033 = vld [vmem:[%s4 + $0x2] sm:$0x1]
  %v1034 = vlaneseq
  %v1035 = vshrl.u32 %v1034, 7
  %v1036 = vsub.s32 0, %v1035
  %v1037 = vrot.slane %v1033, %v1036
  %1039 = vrot.lane.b32.xlu0 %v1037, 64
  %v1040 = vpop.permute.xlu0 %1039
  %v1042 = vmul.f32 %v1032, %v1040
  %1044 = vrot.lane.b32.xlu0 %v1042, 64
  %v1045 = vpop.permute.xlu0 %1044
  %v1047 = vsel %vm1010, %v1045, 0.0
  %1048 = vadd.xlane.f32.xlu0 %v1047
  %v1049 = vpop.xlane.xlu0 %1048
  %v1050 = vld [vmem:[%s4 + $0x3] sm:$0x1]
  %v1051 = vlaneseq
  %v1052 = vshrl.u32 %v1051, 7
  %v1053 = vsub.s32 0, %v1052
  %v1054 = vrot.slane %v1050, %v1053
  %v1055 = vadd.f32 %v1049, %v1054
  %v1056 = vtanh.pop %v1055
  %1058 = vset.pattern.permute.xlu0 0
  %1059 = vperm.xlu0 %1058, %v1056
  %v1060 = vpop.permute.xlu0 %1059
  %vm1062 = vcmask 523264
  %v1063 = vsel %vm1062, %v1021, %v1060
  %1064 = vst [vmem:[%s5] sm:$0x3] %v1063
  // Predicated region
  $region22: #{out_block_forward.1} parent=0 // pred_check
    _
  $region23: #{out_block_forward.1} parent=0 // pred_check_branch
    %1066 = sbr.rel (0) target = $region25
  $region24: #{out_block_forward.1} parent=0 // pred_region
    _
  $region25: #{out_block_forward.1} parent=0 // pred_fallthru
    _
  // Predicated region
  $region26: #{out_block_forward.1} parent=0 // pred_check
    _
  $region27: #{out_block_forward.1} parent=0 // pred_check_branch
    %1068 = sbr.rel (0) target = $region29
  $region28: #{out_block_forward.1} parent=0 // pred_region
    _
  $region29: #{out_block_forward.1} parent=0 // pred_fallthru
    _

</llo_original>
